<compile_context>
chip_gen: v5e
topology: v5e:2x2
jax: 0.10.0
libtpu: 0.0.40
codegen_flags: <defaults>
</compile_context>

<pallas_src>
import functools

import numpy as np
import jax
import jax.numpy as jnp
from jax.experimental import pallas as pl
from jax.experimental.pallas import tpu as pltpu


_TAPS = tuple((dy, dx) for dy in (-1, 0, 1) for dx in (-1, 0, 1))


def _wae_dec_kernel(x_ref, w1_ref, b1_ref, w2_ref, b2_ref, w3_ref, b3_ref,
                    wh_ref, bh_ref, mask_ref, sel_ref, o_ref, *, W):
    """All five convs fused; activations stay in VMEM in (C, N*H*W) layout."""
    P = x_ref.shape[-1]                       # N*H*W pixels on the lane axis

    # 9 per-tap border masks, (1, P) each, loaded once and reused by all convs.
    tap_masks = [mask_ref[t:t + 1, :] for t in range(9)]

    def conv3x3(act, w_ref, b_ref):
        # act: (Cin, P); w_ref: (Cout, 9*Cin) packed im2col weight; b: (Cout,1).
        taps = []
        for t, (dy, dx) in enumerate(_TAPS):
            # tap(dy,dx)[p] = act[p + dy*W + dx], zeroed outside the image.
            shift = (-(dy * W + dx)) % P
            rolled = act if shift == 0 else pltpu.roll(act, shift, axis=1)
            if dy == 0 and dx == 0:
                taps.append(rolled)                       # center tap: no mask
            else:
                taps.append(rolled * tap_masks[t])        # broadcast over sublanes
        im2col = jnp.concatenate(taps, axis=0)            # (9*Cin, P)
        return jnp.dot(w_ref[...], im2col,
                       preferred_element_type=jnp.float32) + b_ref[...]

    # layer1: three stride-1 convs; intermediates never leave VMEM.
    y = conv3x3(x_ref[...], w1_ref, b1_ref)
    y = conv3x3(y, w2_ref, b2_ref)
    y = conv3x3(y, w3_ref, b3_ref)

    # layer2_1 | layer2_2 merged into one Cout=6 stride-1 head ...
    yh = conv3x3(y, wh_ref, bh_ref)                       # (6, P)
    # ... then stride-2 == even-position subsample, done once for both images
    # and both heads with a single 0/1 selection dot.  Lane-dense HBM store.
    o_ref[...] = jnp.dot(yh, sel_ref[...], preferred_element_type=jnp.float32)


# ------------------------- trace-time constant helpers -----------------------
def _border_masks(N, H, W):
    """(9, N*H*W) f32: validity of tap (dy,dx) at each output pixel."""
    r = np.arange(H)
    c = np.arange(W)
    row_ok = {-1: r > 0, 0: np.ones(H, bool), 1: r < H - 1}
    col_ok = {-1: c > 0, 0: np.ones(W, bool), 1: c < W - 1}
    masks = []
    for dy, dx in _TAPS:
        m = row_ok[dy][:, None] & col_ok[dx][None, :]          # (H, W)
        masks.append(np.broadcast_to(m, (N, H, W)).reshape(-1))
    return np.stack(masks).astype(np.float32)


def _stride2_selector(N, H, W):
    """(N*H*W, N*Ho*Wo) 0/1 matrix selecting the even-position pixels."""
    Ho, Wo = H // 2, W // 2
    q = np.arange(N * Ho * Wo)
    n = q // (Ho * Wo)
    rem = q % (Ho * Wo)
    ro, co = rem // Wo, rem % Wo
    target = n * H * W + (2 * ro) * W + 2 * co                  # (N*Ho*Wo,)
    p = np.arange(N * H * W)
    return (p[:, None] == target[None, :]).astype(np.float32)


def _pack_weight(w_hwio):
    """(3,3,cin,cout) HWIO -> (cout, 9*cin_pad) im2col weight, cin padded to 8k."""
    kh, kw, cin, cout = w_hwio.shape
    cpad = -(-cin // 8) * 8
    if cpad != cin:
        w_hwio = jnp.pad(w_hwio, ((0, 0), (0, 0), (0, cpad - cin), (0, 0)))
    return jnp.transpose(w_hwio.reshape(kh * kw * cpad, cout))


# ----------------------------------- wrapper ---------------------------------
@jax.jit
def wae_dec_forward(x_nchw, params):
    """Forward pass of wae_dec.  x_nchw: (N, 3, H, W) -> (x_L, x_H) in NCHW."""
    N, C, H, W = x_nchw.shape
    assert H % 2 == 0 and W % 2 == 0, "stride-2 subsample assumes even H, W"
    P = N * H * W
    Ho, Wo = H // 2, W // 2
    Pd = N * Ho * Wo
    Cpad = -(-C // 8) * 8

    # NCHW -> (C, N*H*W): channels on sublanes, pixels on lanes; pad C 3 -> 8.
    x = jnp.transpose(x_nchw.astype(jnp.float32), (1, 0, 2, 3)).reshape(C, P)
    x = jnp.pad(x, ((0, Cpad - C), (0, 0)))

    # Merge the two stride-2 heads (same 16-channel input) into one Cout=6 conv.
    wh = jnp.concatenate([params["l2_1"][0], params["l2_2"][0]], axis=-1)
    bh = jnp.concatenate([params["l2_1"][1], params["l2_2"][1]], axis=0)
    Cout_head = wh.shape[-1]

    args = (
        x,
        _pack_weight(params["l1_0"][0]), params["l1_0"][1].reshape(-1, 1),
        _pack_weight(params["l1_1"][0]), params["l1_1"][1].reshape(-1, 1),
        _pack_weight(params["l1_2"][0]), params["l1_2"][1].reshape(-1, 1),
        _pack_weight(wh), bh.reshape(-1, 1),
        jnp.asarray(_border_masks(N, H, W)),      # (9, P) constants
        jnp.asarray(_stride2_selector(N, H, W)),  # (P, Pd) constants
    )

    def full_block(shape):
        return pl.BlockSpec(shape, lambda *_: (0,) * len(shape))

    out = pl.pallas_call(
        functools.partial(_wae_dec_kernel, W=W),
        out_shape=jax.ShapeDtypeStruct((Cout_head, Pd), jnp.float32),
        grid=(1,),      # tiny problem: one step; tile rows + "parallel" at scale
        in_specs=[full_block(a.shape) for a in args],
        out_specs=full_block((Cout_head, Pd)),
        compiler_params=pltpu.CompilerParams(
            dimension_semantics=("arbitrary",)),
    )(*args)

    out = out.reshape(Cout_head, N, Ho, Wo)
    x_L = jnp.transpose(out[0:3], (1, 0, 2, 3))
    x_H = jnp.transpose(out[3:6], (1, 0, 2, 3))
    return x_L, x_H


# ------------------------------ parameter init -------------------------------
def _init_conv(key, cin, cout):
    """Deterministic init matching PyTorch Conv2d default bounds (1/sqrt(fan_in))."""
    kw, kb = jax.random.split(key)
    fan_in = cin * 3 * 3
    bound = 1.0 / (fan_in ** 0.5)
    w = jax.random.uniform(kw, (3, 3, cin, cout), jnp.float32, -bound, bound)
    b = jax.random.uniform(kb, (cout,), jnp.float32, -bound, bound)
    return w, b


def init_params(key):
    keys = jax.random.split(key, 5)
    return {
        "l1_0": _init_conv(keys[0], 3, 16),
        "l1_1": _init_conv(keys[1], 16, 16),
        "l1_2": _init_conv(keys[2], 16, 16),
        "l2_1": _init_conv(keys[3], 16, 3),
        "l2_2": _init_conv(keys[4], 16, 3),
    }


# ------------------------- pure-JAX reference check --------------------------
def _conv_ref(x_nhwc, w, b, stride):
    y = jax.lax.conv_general_dilated(
        x_nhwc, w, window_strides=(stride, stride),
        padding=((1, 1), (1, 1)),
        dimension_numbers=("NHWC", "HWIO", "NHWC"))
    return y + b


def _forward_ref(x_nchw, params):
    x = jnp.transpose(x_nchw, (0, 2, 3, 1)).astype(jnp.float32)
    x = _conv_ref(x, *params["l1_0"], stride=1)
    x = _conv_ref(x, *params["l1_1"], stride=1)
    x = _conv_ref(x, *params["l1_2"], stride=1)
    x_L = _conv_ref(x, *params["l2_1"], stride=2)
    x_H = _conv_ref(x, *params["l2_2"], stride=2)
    return (jnp.transpose(x_L, (0, 3, 1, 2)),
            jnp.transpose(x_H, (0, 3, 1, 2)))


if __name__ == "__main__":
    N, C, H, W = 2, 3, 16, 16
    x = jax.random.normal(jax.random.PRNGKey(0), (N, C, H, W), jnp.float32)
    params = init_params(jax.random.PRNGKey(1))

    x_L, x_H = wae_dec_forward(x, params)
    jax.block_until_ready((x_L, x_H))

    assert x_L.shape == (N, 3, H // 2, W // 2), x_L.shape
    assert x_H.shape == (N, 3, H // 2, W // 2), x_H.shape

    rL, rH = _forward_ref(x, params)
    assert jnp.allclose(x_L, rL, atol=1e-4, rtol=1e-4)
    assert jnp.allclose(x_H, rH, atol=1e-4, rtol=1e-4)

    print("KERNEL_OK")
</pallas_src>

<mosaic_0001>
module attributes {stable_mosaic.version = 11 : i64} {
  func.func @_wae_dec_kernel(%arg0: i32, %arg1: memref<8x512xf32, #tpu.memory_space<vmem>>, %arg2: memref<16x72xf32, #tpu.memory_space<vmem>>, %arg3: memref<16x1xf32, #tpu.memory_space<vmem>>, %arg4: memref<16x144xf32, #tpu.memory_space<vmem>>, %arg5: memref<16x1xf32, #tpu.memory_space<vmem>>, %arg6: memref<16x144xf32, #tpu.memory_space<vmem>>, %arg7: memref<16x1xf32, #tpu.memory_space<vmem>>, %arg8: memref<6x144xf32, #tpu.memory_space<vmem>>, %arg9: memref<6x1xf32, #tpu.memory_space<vmem>>, %arg10: memref<9x512xf32, #tpu.memory_space<vmem>>, %arg11: memref<512x128xf32, #tpu.memory_space<vmem>>, %arg12: memref<6x128xf32, #tpu.memory_space<vmem>>) attributes {dimension_semantics = [#tpu.dimension_semantics<arbitrary>], iteration_bounds = array<i64: 1>, scalar_prefetch = 0 : i64, scratch_operands = 0 : i64, tpu.core_type = #tpu.core_type<tc>, window_params = [{pipeline_mode = #tpu.pipeline_mode<synchronous>, transform_indices = @transform_0, window_bounds = array<i64: 8, 512>}, {pipeline_mode = #tpu.pipeline_mode<synchronous>, transform_indices = @transform_1, window_bounds = array<i64: 16, 72>}, {pipeline_mode = #tpu.pipeline_mode<synchronous>, transform_indices = @transform_2, window_bounds = array<i64: 16, 1>}, {pipeline_mode = #tpu.pipeline_mode<synchronous>, transform_indices = @transform_3, window_bounds = array<i64: 16, 144>}, {pipeline_mode = #tpu.pipeline_mode<synchronous>, transform_indices = @transform_4, window_bounds = array<i64: 16, 1>}, {pipeline_mode = #tpu.pipeline_mode<synchronous>, transform_indices = @transform_5, window_bounds = array<i64: 16, 144>}, {pipeline_mode = #tpu.pipeline_mode<synchronous>, transform_indices = @transform_6, window_bounds = array<i64: 16, 1>}, {pipeline_mode = #tpu.pipeline_mode<synchronous>, transform_indices = @transform_7, window_bounds = array<i64: 6, 144>}, {pipeline_mode = #tpu.pipeline_mode<synchronous>, transform_indices = @transform_8, window_bounds = array<i64: 6, 1>}, {pipeline_mode = #tpu.pipeline_mode<synchronous>, transform_indices = @transform_9, window_bounds = array<i64: 9, 512>}, {pipeline_mode = #tpu.pipeline_mode<synchronous>, transform_indices = @transform_10, window_bounds = array<i64: 512, 128>}, {pipeline_mode = #tpu.pipeline_mode<synchronous>, transform_indices = @transform_11, window_bounds = array<i64: 6, 128>}]} {
    %c0 = arith.constant 0 : index
    %c0_0 = arith.constant 0 : index
    %0 = vector.load %arg10[%c0, %c0_0] : memref<9x512xf32, #tpu.memory_space<vmem>>, vector<1x512xf32>
    %c1 = arith.constant 1 : index
    %c0_1 = arith.constant 0 : index
    %1 = vector.load %arg10[%c1, %c0_1] : memref<9x512xf32, #tpu.memory_space<vmem>>, vector<1x512xf32>
    %c2 = arith.constant 2 : index
    %c0_2 = arith.constant 0 : index
    %2 = vector.load %arg10[%c2, %c0_2] : memref<9x512xf32, #tpu.memory_space<vmem>>, vector<1x512xf32>
    %c3 = arith.constant 3 : index
    %c0_3 = arith.constant 0 : index
    %3 = vector.load %arg10[%c3, %c0_3] : memref<9x512xf32, #tpu.memory_space<vmem>>, vector<1x512xf32>
    %c5 = arith.constant 5 : index
    %c0_4 = arith.constant 0 : index
    %4 = vector.load %arg10[%c5, %c0_4] : memref<9x512xf32, #tpu.memory_space<vmem>>, vector<1x512xf32>
    %c6 = arith.constant 6 : index
    %c0_5 = arith.constant 0 : index
    %5 = vector.load %arg10[%c6, %c0_5] : memref<9x512xf32, #tpu.memory_space<vmem>>, vector<1x512xf32>
    %c7 = arith.constant 7 : index
    %c0_6 = arith.constant 0 : index
    %6 = vector.load %arg10[%c7, %c0_6] : memref<9x512xf32, #tpu.memory_space<vmem>>, vector<1x512xf32>
    %c8 = arith.constant 8 : index
    %c0_7 = arith.constant 0 : index
    %7 = vector.load %arg10[%c8, %c0_7] : memref<9x512xf32, #tpu.memory_space<vmem>>, vector<1x512xf32>
    %c0_8 = arith.constant 0 : index
    %c0_9 = arith.constant 0 : index
    %8 = vector.load %arg1[%c0_8, %c0_9] : memref<8x512xf32, #tpu.memory_space<vmem>>, vector<8x512xf32>
    %c17_i32 = arith.constant 17 : i32
    %9 = tpu.dynamic_rotate %8 by %c17_i32 dim 1 : vector<8x512xf32>, i32 -> vector<8x512xf32>
    %10 = vector.broadcast %0 : vector<1x512xf32> to vector<8x512xf32>
    %11 = arith.mulf %9, %10 : vector<8x512xf32>
    %c16_i32 = arith.constant 16 : i32
    %12 = tpu.dynamic_rotate %8 by %c16_i32 dim 1 : vector<8x512xf32>, i32 -> vector<8x512xf32>
    %13 = vector.broadcast %1 : vector<1x512xf32> to vector<8x512xf32>
    %14 = arith.mulf %12, %13 : vector<8x512xf32>
    %c15_i32 = arith.constant 15 : i32
    %15 = tpu.dynamic_rotate %8 by %c15_i32 dim 1 : vector<8x512xf32>, i32 -> vector<8x512xf32>
    %16 = vector.broadcast %2 : vector<1x512xf32> to vector<8x512xf32>
    %17 = arith.mulf %15, %16 : vector<8x512xf32>
    %c1_i32 = arith.constant 1 : i32
    %18 = tpu.dynamic_rotate %8 by %c1_i32 dim 1 : vector<8x512xf32>, i32 -> vector<8x512xf32>
    %19 = vector.broadcast %3 : vector<1x512xf32> to vector<8x512xf32>
    %20 = arith.mulf %18, %19 : vector<8x512xf32>
    %c511_i32 = arith.constant 511 : i32
    %21 = tpu.dynamic_rotate %8 by %c511_i32 dim 1 : vector<8x512xf32>, i32 -> vector<8x512xf32>
    %22 = vector.broadcast %4 : vector<1x512xf32> to vector<8x512xf32>
    %23 = arith.mulf %21, %22 : vector<8x512xf32>
    %c497_i32 = arith.constant 497 : i32
    %24 = tpu.dynamic_rotate %8 by %c497_i32 dim 1 : vector<8x512xf32>, i32 -> vector<8x512xf32>
    %25 = vector.broadcast %5 : vector<1x512xf32> to vector<8x512xf32>
    %26 = arith.mulf %24, %25 : vector<8x512xf32>
    %c496_i32 = arith.constant 496 : i32
    %27 = tpu.dynamic_rotate %8 by %c496_i32 dim 1 : vector<8x512xf32>, i32 -> vector<8x512xf32>
    %28 = vector.broadcast %6 : vector<1x512xf32> to vector<8x512xf32>
    %29 = arith.mulf %27, %28 : vector<8x512xf32>
    %c495_i32 = arith.constant 495 : i32
    %30 = tpu.dynamic_rotate %8 by %c495_i32 dim 1 : vector<8x512xf32>, i32 -> vector<8x512xf32>
    %31 = vector.broadcast %7 : vector<1x512xf32> to vector<8x512xf32>
    %32 = arith.mulf %30, %31 : vector<8x512xf32>
    %33 = tpu.concatenate %11, %14, %17, %20, %8, %23, %26, %29, %32 in 0 : vector<8x512xf32>, vector<8x512xf32>, vector<8x512xf32>, vector<8x512xf32>, vector<8x512xf32>, vector<8x512xf32>, vector<8x512xf32>, vector<8x512xf32>, vector<8x512xf32> -> vector<72x512xf32>
    %c0_10 = arith.constant 0 : index
    %c0_11 = arith.constant 0 : index
    %34 = vector.load %arg2[%c0_10, %c0_11] : memref<16x72xf32, #tpu.memory_space<vmem>>, vector<16x72xf32>
    %cst = arith.constant dense<0.000000e+00> : vector<16x512xf32>
    %35 = tpu.matmul %34, %33, %cst {dimension_numbers = #tpu.dot_dimension_numbers<[1], [0], [0], [1], [0, 0, 1, 1], [], []>} : vector<16x72xf32>, vector<72x512xf32>, vector<16x512xf32> -> vector<16x512xf32>
    %c0_12 = arith.constant 0 : index
    %c0_13 = arith.constant 0 : index
    %36 = vector.load %arg3[%c0_12, %c0_13] : memref<16x1xf32, #tpu.memory_space<vmem>>, vector<16x1xf32>
    %37 = vector.broadcast %36 : vector<16x1xf32> to vector<16x512xf32>
    %38 = arith.addf %35, %37 : vector<16x512xf32>
    %c17_i32_14 = arith.constant 17 : i32
    %39 = tpu.dynamic_rotate %38 by %c17_i32_14 dim 1 : vector<16x512xf32>, i32 -> vector<16x512xf32>
    %40 = vector.broadcast %0 : vector<1x512xf32> to vector<16x512xf32>
    %41 = arith.mulf %39, %40 : vector<16x512xf32>
    %c16_i32_15 = arith.constant 16 : i32
    %42 = tpu.dynamic_rotate %38 by %c16_i32_15 dim 1 : vector<16x512xf32>, i32 -> vector<16x512xf32>
    %43 = vector.broadcast %1 : vector<1x512xf32> to vector<16x512xf32>
    %44 = arith.mulf %42, %43 : vector<16x512xf32>
    %c15_i32_16 = arith.constant 15 : i32
    %45 = tpu.dynamic_rotate %38 by %c15_i32_16 dim 1 : vector<16x512xf32>, i32 -> vector<16x512xf32>
    %46 = vector.broadcast %2 : vector<1x512xf32> to vector<16x512xf32>
    %47 = arith.mulf %45, %46 : vector<16x512xf32>
    %c1_i32_17 = arith.constant 1 : i32
    %48 = tpu.dynamic_rotate %38 by %c1_i32_17 dim 1 : vector<16x512xf32>, i32 -> vector<16x512xf32>
    %49 = vector.broadcast %3 : vector<1x512xf32> to vector<16x512xf32>
    %50 = arith.mulf %48, %49 : vector<16x512xf32>
    %c511_i32_18 = arith.constant 511 : i32
    %51 = tpu.dynamic_rotate %38 by %c511_i32_18 dim 1 : vector<16x512xf32>, i32 -> vector<16x512xf32>
    %52 = vector.broadcast %4 : vector<1x512xf32> to vector<16x512xf32>
    %53 = arith.mulf %51, %52 : vector<16x512xf32>
    %c497_i32_19 = arith.constant 497 : i32
    %54 = tpu.dynamic_rotate %38 by %c497_i32_19 dim 1 : vector<16x512xf32>, i32 -> vector<16x512xf32>
    %55 = vector.broadcast %5 : vector<1x512xf32> to vector<16x512xf32>
    %56 = arith.mulf %54, %55 : vector<16x512xf32>
    %c496_i32_20 = arith.constant 496 : i32
    %57 = tpu.dynamic_rotate %38 by %c496_i32_20 dim 1 : vector<16x512xf32>, i32 -> vector<16x512xf32>
    %58 = vector.broadcast %6 : vector<1x512xf32> to vector<16x512xf32>
    %59 = arith.mulf %57, %58 : vector<16x512xf32>
    %c495_i32_21 = arith.constant 495 : i32
    %60 = tpu.dynamic_rotate %38 by %c495_i32_21 dim 1 : vector<16x512xf32>, i32 -> vector<16x512xf32>
    %61 = vector.broadcast %7 : vector<1x512xf32> to vector<16x512xf32>
    %62 = arith.mulf %60, %61 : vector<16x512xf32>
    %63 = tpu.concatenate %41, %44, %47, %50, %38, %53, %56, %59, %62 in 0 : vector<16x512xf32>, vector<16x512xf32>, vector<16x512xf32>, vector<16x512xf32>, vector<16x512xf32>, vector<16x512xf32>, vector<16x512xf32>, vector<16x512xf32>, vector<16x512xf32> -> vector<144x512xf32>
    %c0_22 = arith.constant 0 : index
    %c0_23 = arith.constant 0 : index
    %64 = vector.load %arg4[%c0_22, %c0_23] : memref<16x144xf32, #tpu.memory_space<vmem>>, vector<16x144xf32>
    %cst_24 = arith.constant dense<0.000000e+00> : vector<16x512xf32>
    %65 = tpu.matmul %64, %63, %cst_24 {dimension_numbers = #tpu.dot_dimension_numbers<[1], [0], [0], [1], [0, 0, 1, 1], [], []>} : vector<16x144xf32>, vector<144x512xf32>, vector<16x512xf32> -> vector<16x512xf32>
    %c0_25 = arith.constant 0 : index
    %c0_26 = arith.constant 0 : index
    %66 = vector.load %arg5[%c0_25, %c0_26] : memref<16x1xf32, #tpu.memory_space<vmem>>, vector<16x1xf32>
    %67 = vector.broadcast %66 : vector<16x1xf32> to vector<16x512xf32>
    %68 = arith.addf %65, %67 : vector<16x512xf32>
    %c17_i32_27 = arith.constant 17 : i32
    %69 = tpu.dynamic_rotate %68 by %c17_i32_27 dim 1 : vector<16x512xf32>, i32 -> vector<16x512xf32>
    %70 = vector.broadcast %0 : vector<1x512xf32> to vector<16x512xf32>
    %71 = arith.mulf %69, %70 : vector<16x512xf32>
    %c16_i32_28 = arith.constant 16 : i32
    %72 = tpu.dynamic_rotate %68 by %c16_i32_28 dim 1 : vector<16x512xf32>, i32 -> vector<16x512xf32>
    %73 = vector.broadcast %1 : vector<1x512xf32> to vector<16x512xf32>
    %74 = arith.mulf %72, %73 : vector<16x512xf32>
    %c15_i32_29 = arith.constant 15 : i32
    %75 = tpu.dynamic_rotate %68 by %c15_i32_29 dim 1 : vector<16x512xf32>, i32 -> vector<16x512xf32>
    %76 = vector.broadcast %2 : vector<1x512xf32> to vector<16x512xf32>
    %77 = arith.mulf %75, %76 : vector<16x512xf32>
    %c1_i32_30 = arith.constant 1 : i32
    %78 = tpu.dynamic_rotate %68 by %c1_i32_30 dim 1 : vector<16x512xf32>, i32 -> vector<16x512xf32>
    %79 = vector.broadcast %3 : vector<1x512xf32> to vector<16x512xf32>
    %80 = arith.mulf %78, %79 : vector<16x512xf32>
    %c511_i32_31 = arith.constant 511 : i32
    %81 = tpu.dynamic_rotate %68 by %c511_i32_31 dim 1 : vector<16x512xf32>, i32 -> vector<16x512xf32>
    %82 = vector.broadcast %4 : vector<1x512xf32> to vector<16x512xf32>
    %83 = arith.mulf %81, %82 : vector<16x512xf32>
    %c497_i32_32 = arith.constant 497 : i32
    %84 = tpu.dynamic_rotate %68 by %c497_i32_32 dim 1 : vector<16x512xf32>, i32 -> vector<16x512xf32>
    %85 = vector.broadcast %5 : vector<1x512xf32> to vector<16x512xf32>
    %86 = arith.mulf %84, %85 : vector<16x512xf32>
    %c496_i32_33 = arith.constant 496 : i32
    %87 = tpu.dynamic_rotate %68 by %c496_i32_33 dim 1 : vector<16x512xf32>, i32 -> vector<16x512xf32>
    %88 = vector.broadcast %6 : vector<1x512xf32> to vector<16x512xf32>
    %89 = arith.mulf %87, %88 : vector<16x512xf32>
    %c495_i32_34 = arith.constant 495 : i32
    %90 = tpu.dynamic_rotate %68 by %c495_i32_34 dim 1 : vector<16x512xf32>, i32 -> vector<16x512xf32>
    %91 = vector.broadcast %7 : vector<1x512xf32> to vector<16x512xf32>
    %92 = arith.mulf %90, %91 : vector<16x512xf32>
    %93 = tpu.concatenate %71, %74, %77, %80, %68, %83, %86, %89, %92 in 0 : vector<16x512xf32>, vector<16x512xf32>, vector<16x512xf32>, vector<16x512xf32>, vector<16x512xf32>, vector<16x512xf32>, vector<16x512xf32>, vector<16x512xf32>, vector<16x512xf32> -> vector<144x512xf32>
    %c0_35 = arith.constant 0 : index
    %c0_36 = arith.constant 0 : index
    %94 = vector.load %arg6[%c0_35, %c0_36] : memref<16x144xf32, #tpu.memory_space<vmem>>, vector<16x144xf32>
    %cst_37 = arith.constant dense<0.000000e+00> : vector<16x512xf32>
    %95 = tpu.matmul %94, %93, %cst_37 {dimension_numbers = #tpu.dot_dimension_numbers<[1], [0], [0], [1], [0, 0, 1, 1], [], []>} : vector<16x144xf32>, vector<144x512xf32>, vector<16x512xf32> -> vector<16x512xf32>
    %c0_38 = arith.constant 0 : index
    %c0_39 = arith.constant 0 : index
    %96 = vector.load %arg7[%c0_38, %c0_39] : memref<16x1xf32, #tpu.memory_space<vmem>>, vector<16x1xf32>
    %97 = vector.broadcast %96 : vector<16x1xf32> to vector<16x512xf32>
    %98 = arith.addf %95, %97 : vector<16x512xf32>
    %c17_i32_40 = arith.constant 17 : i32
    %99 = tpu.dynamic_rotate %98 by %c17_i32_40 dim 1 : vector<16x512xf32>, i32 -> vector<16x512xf32>
    %100 = vector.broadcast %0 : vector<1x512xf32> to vector<16x512xf32>
    %101 = arith.mulf %99, %100 : vector<16x512xf32>
    %c16_i32_41 = arith.constant 16 : i32
    %102 = tpu.dynamic_rotate %98 by %c16_i32_41 dim 1 : vector<16x512xf32>, i32 -> vector<16x512xf32>
    %103 = vector.broadcast %1 : vector<1x512xf32> to vector<16x512xf32>
    %104 = arith.mulf %102, %103 : vector<16x512xf32>
    %c15_i32_42 = arith.constant 15 : i32
    %105 = tpu.dynamic_rotate %98 by %c15_i32_42 dim 1 : vector<16x512xf32>, i32 -> vector<16x512xf32>
    %106 = vector.broadcast %2 : vector<1x512xf32> to vector<16x512xf32>
    %107 = arith.mulf %105, %106 : vector<16x512xf32>
    %c1_i32_43 = arith.constant 1 : i32
    %108 = tpu.dynamic_rotate %98 by %c1_i32_43 dim 1 : vector<16x512xf32>, i32 -> vector<16x512xf32>
    %109 = vector.broadcast %3 : vector<1x512xf32> to vector<16x512xf32>
    %110 = arith.mulf %108, %109 : vector<16x512xf32>
    %c511_i32_44 = arith.constant 511 : i32
    %111 = tpu.dynamic_rotate %98 by %c511_i32_44 dim 1 : vector<16x512xf32>, i32 -> vector<16x512xf32>
    %112 = vector.broadcast %4 : vector<1x512xf32> to vector<16x512xf32>
    %113 = arith.mulf %111, %112 : vector<16x512xf32>
    %c497_i32_45 = arith.constant 497 : i32
    %114 = tpu.dynamic_rotate %98 by %c497_i32_45 dim 1 : vector<16x512xf32>, i32 -> vector<16x512xf32>
    %115 = vector.broadcast %5 : vector<1x512xf32> to vector<16x512xf32>
    %116 = arith.mulf %114, %115 : vector<16x512xf32>
    %c496_i32_46 = arith.constant 496 : i32
    %117 = tpu.dynamic_rotate %98 by %c496_i32_46 dim 1 : vector<16x512xf32>, i32 -> vector<16x512xf32>
    %118 = vector.broadcast %6 : vector<1x512xf32> to vector<16x512xf32>
    %119 = arith.mulf %117, %118 : vector<16x512xf32>
    %c495_i32_47 = arith.constant 495 : i32
    %120 = tpu.dynamic_rotate %98 by %c495_i32_47 dim 1 : vector<16x512xf32>, i32 -> vector<16x512xf32>
    %121 = vector.broadcast %7 : vector<1x512xf32> to vector<16x512xf32>
    %122 = arith.mulf %120, %121 : vector<16x512xf32>
    %123 = tpu.concatenate %101, %104, %107, %110, %98, %113, %116, %119, %122 in 0 : vector<16x512xf32>, vector<16x512xf32>, vector<16x512xf32>, vector<16x512xf32>, vector<16x512xf32>, vector<16x512xf32>, vector<16x512xf32>, vector<16x512xf32>, vector<16x512xf32> -> vector<144x512xf32>
    %c0_48 = arith.constant 0 : index
    %c0_49 = arith.constant 0 : index
    %124 = vector.load %arg8[%c0_48, %c0_49] : memref<6x144xf32, #tpu.memory_space<vmem>>, vector<6x144xf32>
    %cst_50 = arith.constant dense<0.000000e+00> : vector<6x512xf32>
    %125 = tpu.matmul %124, %123, %cst_50 {dimension_numbers = #tpu.dot_dimension_numbers<[1], [0], [0], [1], [0, 0, 1, 1], [], []>} : vector<6x144xf32>, vector<144x512xf32>, vector<6x512xf32> -> vector<6x512xf32>
    %c0_51 = arith.constant 0 : index
    %c0_52 = arith.constant 0 : index
    %126 = vector.load %arg9[%c0_51, %c0_52] : memref<6x1xf32, #tpu.memory_space<vmem>>, vector<6x1xf32>
    %127 = vector.broadcast %126 : vector<6x1xf32> to vector<6x512xf32>
    %128 = arith.addf %125, %127 : vector<6x512xf32>
    %c0_53 = arith.constant 0 : index
    %c0_54 = arith.constant 0 : index
    %129 = vector.load %arg11[%c0_53, %c0_54] : memref<512x128xf32, #tpu.memory_space<vmem>>, vector<512x128xf32>
    %cst_55 = arith.constant dense<0.000000e+00> : vector<6x128xf32>
    %130 = tpu.matmul %128, %129, %cst_55 {dimension_numbers = #tpu.dot_dimension_numbers<[1], [0], [0], [1], [0, 0, 1, 1], [], []>} : vector<6x512xf32>, vector<512x128xf32>, vector<6x128xf32> -> vector<6x128xf32>
    %c0_56 = arith.constant 0 : index
    %c0_57 = arith.constant 0 : index
    %131 = vector.load %arg12[%c0_56, %c0_57] : memref<6x128xf32, #tpu.memory_space<vmem>>, vector<6x128xf32>
    tpu.vector_store %arg12[%c0_56, %c0_57], %130 {strides = array<i32>} : memref<6x128xf32, #tpu.memory_space<vmem>>, vector<6x128xf32>,
    return
  }
  func.func @transform_0(%arg0: i32) -> (i32, i32) {
    %c0_i32 = arith.constant 0 : i32
    %c0_i32_0 = arith.constant 0 : i32
    %c0_i32_1 = arith.constant 0 : i32
    return %c0_i32, %c0_i32_0 : i32, i32
  }
  func.func @transform_1(%arg0: i32) -> (i32, i32) {
    %c0_i32 = arith.constant 0 : i32
    %c0_i32_0 = arith.constant 0 : i32
    %c0_i32_1 = arith.constant 0 : i32
    return %c0_i32, %c0_i32_0 : i32, i32
  }
  func.func @transform_2(%arg0: i32) -> (i32, i32) {
    %c0_i32 = arith.constant 0 : i32
    %c0_i32_0 = arith.constant 0 : i32
    %c0_i32_1 = arith.constant 0 : i32
    return %c0_i32, %c0_i32_0 : i32, i32
  }
  func.func @transform_3(%arg0: i32) -> (i32, i32) {
    %c0_i32 = arith.constant 0 : i32
    %c0_i32_0 = arith.constant 0 : i32
    %c0_i32_1 = arith.constant 0 : i32
    return %c0_i32, %c0_i32_0 : i32, i32
  }
  func.func @transform_4(%arg0: i32) -> (i32, i32) {
    %c0_i32 = arith.constant 0 : i32
    %c0_i32_0 = arith.constant 0 : i32
    %c0_i32_1 = arith.constant 0 : i32
    return %c0_i32, %c0_i32_0 : i32, i32
  }
  func.func @transform_5(%arg0: i32) -> (i32, i32) {
    %c0_i32 = arith.constant 0 : i32
    %c0_i32_0 = arith.constant 0 : i32
    %c0_i32_1 = arith.constant 0 : i32
    return %c0_i32, %c0_i32_0 : i32, i32
  }
  func.func @transform_6(%arg0: i32) -> (i32, i32) {
    %c0_i32 = arith.constant 0 : i32
    %c0_i32_0 = arith.constant 0 : i32
    %c0_i32_1 = arith.constant 0 : i32
    return %c0_i32, %c0_i32_0 : i32, i32
  }
  func.func @transform_7(%arg0: i32) -> (i32, i32) {
    %c0_i32 = arith.constant 0 : i32
    %c0_i32_0 = arith.constant 0 : i32
    %c0_i32_1 = arith.constant 0 : i32
    return %c0_i32, %c0_i32_0 : i32, i32
  }
  func.func @transform_8(%arg0: i32) -> (i32, i32) {
    %c0_i32 = arith.constant 0 : i32
    %c0_i32_0 = arith.constant 0 : i32
    %c0_i32_1 = arith.constant 0 : i32
    return %c0_i32, %c0_i32_0 : i32, i32
  }
  func.func @transform_9(%arg0: i32) -> (i32, i32) {
    %c0_i32 = arith.constant 0 : i32
    %c0_i32_0 = arith.constant 0 : i32
    %c0_i32_1 = arith.constant 0 : i32
    return %c0_i32, %c0_i32_0 : i32, i32
  }
  func.func @transform_10(%arg0: i32) -> (i32, i32) {
    %c0_i32 = arith.constant 0 : i32
    %c0_i32_0 = arith.constant 0 : i32
    %c0_i32_1 = arith.constant 0 : i32
    return %c0_i32, %c0_i32_0 : i32, i32
  }
  func.func @transform_11(%arg0: i32) -> (i32, i32) {
    %c0_i32 = arith.constant 0 : i32
    %c0_i32_0 = arith.constant 0 : i32
    %c0_i32_1 = arith.constant 0 : i32
    return %c0_i32, %c0_i32_0 : i32, i32
  }
}

</mosaic_0001>

<llo_original>
// kernel: wae_dec_forward.1
$region0: #{wae_dec_forward.1}
  #allocation0 [shape = 'u32[]', space=smem, size = 0x4, offset = 0x4, fixed_abs, tag = 'smem constant byte address 0x4 - core index']
  #allocation1 [shape = 'u32[72,128]{1,0:T(1,128)}', space=vmem, size = 0x9000, scoped, tag = 'internal scratch']
  %s0 = inlined_call_operand.vmem [shape: f32[8,512], index: 0, kind: input, shape index: {}]
  %s1 = inlined_call_operand.vmem [shape: f32[16,72], index: 1, kind: input, shape index: {}]
  %s2 = inlined_call_operand.vmem [shape: f32[16,1], index: 2, kind: input, shape index: {}]
  %s3 = inlined_call_operand.vmem [shape: f32[16,144], index: 3, kind: input, shape index: {}]
  %s4 = inlined_call_operand.vmem [shape: f32[16,1], index: 4, kind: input, shape index: {}]
  %s5 = inlined_call_operand.vmem [shape: f32[16,144], index: 5, kind: input, shape index: {}]
  %s6 = inlined_call_operand.vmem [shape: f32[16,1], index: 6, kind: input, shape index: {}]
  %s7 = inlined_call_operand.vmem [shape: f32[6,144], index: 7, kind: input, shape index: {}]
  %s8 = inlined_call_operand.vmem [shape: f32[6,1], index: 8, kind: input, shape index: {}]
  %s9 = inlined_call_operand.vmem [shape: f32[9,512], index: 9, kind: input, shape index: {}]
  %s10 = inlined_call_operand.hbm [shape: f32[512,128], index: 10, kind: input, shape index: {}]
  %s11 = inlined_call_operand.vmem [shape: f32[6,128], index: 11, kind: output, shape index: {}]
  %s12 = sld [smem:[#allocation0]]
  $region58: #{wae_dec_forward.1} parent=0
    _
  %s14 = ssub.s32 1, %s12
  %s15 = scalar_select 0, %s14, %s12
  $region1: #{wae_dec_forward.1} parent=0
    #allocation2 [shape = 'u8[262144]{0}', space=vmem, size = 0x40000, scoped, tag = 'input window, operand 10, single buffered']
    #allocation3 [shape = 's32[1]{0}', space=sflag, size = 0x4, scoped, tag = 'scoped memory for wae_dec_forward.1']
    %16 = vsyncpa [#allocation3], 0
    // Predicated region
    $region2: #{wae_dec_forward.1} parent=1 // pred_check
      _
    $region3: #{wae_dec_forward.1} parent=1 // pred_check_branch
      %18 = sbr.rel (0) target = $region5
    $region4: #{wae_dec_forward.1} parent=1 // pred_region
      _
    $region5: #{wae_dec_forward.1} parent=1 // pred_fallthru
      _
    // Predicated region
    $region6: #{wae_dec_forward.1} parent=1 // pred_check
      _
    $region7: #{wae_dec_forward.1} parent=1 // pred_check_branch
      %20 = sbr.rel (0) target = $region9
    $region8: #{wae_dec_forward.1} parent=1 // pred_region
      _
    $region9: #{wae_dec_forward.1} parent=1 // pred_fallthru
      _
    // Predicated region
    $region10: #{wae_dec_forward.1} parent=1 // pred_check
      _
    $region11: #{wae_dec_forward.1} parent=1 // pred_check_branch
      %22 = sbr.rel (0) target = $region13
    $region12: #{wae_dec_forward.1} parent=1 // pred_region
      _
    $region13: #{wae_dec_forward.1} parent=1 // pred_fallthru
      _
    // Predicated region
    $region14: #{wae_dec_forward.1} parent=1 // pred_check
      _
    $region15: #{wae_dec_forward.1} parent=1 // pred_check_branch
      %24 = sbr.rel (0) target = $region17
    $region16: #{wae_dec_forward.1} parent=1 // pred_region
      _
    $region17: #{wae_dec_forward.1} parent=1 // pred_fallthru
      _
    // Predicated region
    $region18: #{wae_dec_forward.1} parent=1 // pred_check
      _
    $region19: #{wae_dec_forward.1} parent=1 // pred_check_branch
      %26 = sbr.rel (0) target = $region21
    $region20: #{wae_dec_forward.1} parent=1 // pred_region
      _
    $region21: #{wae_dec_forward.1} parent=1 // pred_fallthru
      _
    // Predicated region
    $region22: #{wae_dec_forward.1} parent=1 // pred_check
      _
    $region23: #{wae_dec_forward.1} parent=1 // pred_check_branch
      %28 = sbr.rel (0) target = $region25
    $region24: #{wae_dec_forward.1} parent=1 // pred_region
      _
    $region25: #{wae_dec_forward.1} parent=1 // pred_fallthru
      _
    // Predicated region
    $region26: #{wae_dec_forward.1} parent=1 // pred_check
      _
    $region27: #{wae_dec_forward.1} parent=1 // pred_check_branch
      %30 = sbr.rel (0) target = $region29
    $region28: #{wae_dec_forward.1} parent=1 // pred_region
      _
    $region29: #{wae_dec_forward.1} parent=1 // pred_fallthru
      _
    // Predicated region
    $region30: #{wae_dec_forward.1} parent=1 // pred_check
      _
    $region31: #{wae_dec_forward.1} parent=1 // pred_check_branch
      %32 = sbr.rel (0) target = $region33
    $region32: #{wae_dec_forward.1} parent=1 // pred_region
      _
    $region33: #{wae_dec_forward.1} parent=1 // pred_fallthru
      _
    // Predicated region
    $region34: #{wae_dec_forward.1} parent=1 // pred_check
      _
    $region35: #{wae_dec_forward.1} parent=1 // pred_check_branch
      %34 = sbr.rel (0) target = $region37
    $region36: #{wae_dec_forward.1} parent=1 // pred_region
      _
    $region37: #{wae_dec_forward.1} parent=1 // pred_fallthru
      _
    // Predicated region
    $region38: #{wae_dec_forward.1} parent=1 // pred_check
      _
    $region39: #{wae_dec_forward.1} parent=1 // pred_check_branch
      %36 = sbr.rel (0) target = $region41
    $region40: #{wae_dec_forward.1} parent=1 // pred_region
      _
    $region41: #{wae_dec_forward.1} parent=1 // pred_fallthru
      _
    // Predicated region
    $region42: #{wae_dec_forward.1} parent=1 // pred_check
      _
    $region43: #{wae_dec_forward.1} parent=1 // pred_check_branch
      %38 = sbr.rel (0) target = $region45
    $region44: #{wae_dec_forward.1} parent=1 // pred_region
      %40 = vsyncadd [#allocation3], 0
      %s41 = sshll.u32 %s10, 4
      %s42 = int_to_ptr.hbm [resolvable:$true] %s41
      %s43 = sshll.u32 [#allocation2], 4
      %s44 = int_to_ptr.vmem [resolvable:$true] %s43
      %49 = dma.hbm_to_vmem [thread:$0]  %s42, 8192, %s44, [#allocation3], 128, 128, 8
    $region45: #{wae_dec_forward.1} parent=1 // pred_fallthru
      _
    // Predicated region
    $region46: #{wae_dec_forward.1} parent=1 // pred_check
      _
    $region47: #{wae_dec_forward.1} parent=1 // pred_check_branch
      %51 = sbr.rel (0) target = $region49
    $region48: #{wae_dec_forward.1} parent=1 // pred_region
      %53 = dma.done [#allocation3], 8192
    $region49: #{wae_dec_forward.1} parent=1 // pred_fallthru
      _
    %v54 = vld [vmem:[%s9] ss:$8 sm:$0xf]
    %s55 = scalar_lea.vmem %s9, 1
    %v56 = vld [vmem:[%s55] ss:$8 sm:$0xf]
    %s57 = scalar_lea.vmem %s9, 2
    %v58 = vld [vmem:[%s57] ss:$8 sm:$0xf]
    %s59 = scalar_lea.vmem %s9, 3
    %v60 = vld [vmem:[%s59] ss:$8 sm:$0xf]
    %s61 = scalar_lea.vmem %s9, 5
    %v62 = vld [vmem:[%s61] ss:$8 sm:$0xf]
    %s63 = scalar_lea.vmem %s9, 6
    %v64 = vld [vmem:[%s63] ss:$8 sm:$0xf]
    %s65 = scalar_lea.vmem %s9, 7
    %v66 = vld [vmem:[%s65] ss:$8 sm:$0xf]
    %s67 = scalar_lea.vmem %s9, 32
    %v68 = vld [vmem:[%s67] ss:$8 sm:$0xf]
    %v69 = vld [vmem:[%s0] sm:$0xff]
    %v70 = vld [vmem:[%s0 + $0x8] sm:$0xff]
    %v71 = vld [vmem:[%s0 + $0x10] sm:$0xff]
    %v72 = vld [vmem:[%s0 + $0x18] sm:$0xff]
    %73 = vrot.lane.b32.xlu0 %v69, 17
    %v74 = vpop.permute.xlu0 %73
    %75 = vrot.lane.b32.xlu0 %v70, 17
    %v76 = vpop.permute.xlu0 %75
    %77 = vrot.lane.b32.xlu0 %v71, 17
    %v78 = vpop.permute.xlu0 %77
    %79 = vrot.lane.b32.xlu0 %v72, 17
    %v80 = vpop.permute.xlu0 %79
    %v81 = vlaneseq
    %v82 = vand.u32 %v81, 127
    %vm83 = vcmp.lt.s32.totalorder %v82, 17
    %v84 = vsel %vm83, %v78, %v80
    %v85 = vsel %vm83, %v76, %v78
    %v86 = vsel %vm83, %v74, %v76
    %v87 = vsel %vm83, %v80, %v74
    %v89 = vperm.slane %v54, 0
    %v90 = vperm.slane %v54, 1
    %v91 = vperm.slane %v54, 2
    %v92 = vperm.slane %v54, 3
    %v97 = vmul.f32 %v87, %v89
    %v98 = vmul.f32 %v86, %v90
    %v99 = vmul.f32 %v85, %v91
    %v100 = vmul.f32 %v84, %v92
    %101 = vrot.lane.b32.xlu0 %v69, 16
    %v102 = vpop.permute.xlu0 %101
    %103 = vrot.lane.b32.xlu0 %v70, 16
    %v104 = vpop.permute.xlu0 %103
    %105 = vrot.lane.b32.xlu0 %v71, 16
    %v106 = vpop.permute.xlu0 %105
    %107 = vrot.lane.b32.xlu0 %v72, 16
    %v108 = vpop.permute.xlu0 %107
    %vm109 = vcmp.lt.s32.totalorder %v82, 16
    %v110 = vsel %vm109, %v106, %v108
    %v111 = vsel %vm109, %v104, %v106
    %v112 = vsel %vm109, %v102, %v104
    %v113 = vsel %vm109, %v108, %v102
    %v115 = vperm.slane %v56, 0
    %v116 = vperm.slane %v56, 1
    %v117 = vperm.slane %v56, 2
    %v118 = vperm.slane %v56, 3
    %v123 = vmul.f32 %v113, %v115
    %v124 = vmul.f32 %v112, %v116
    %v125 = vmul.f32 %v111, %v117
    %v126 = vmul.f32 %v110, %v118
    %127 = vrot.lane.b32.xlu0 %v69, 15
    %v128 = vpop.permute.xlu0 %127
    %129 = vrot.lane.b32.xlu0 %v70, 15
    %v130 = vpop.permute.xlu0 %129
    %131 = vrot.lane.b32.xlu0 %v71, 15
    %v132 = vpop.permute.xlu0 %131
    %133 = vrot.lane.b32.xlu0 %v72, 15
    %v134 = vpop.permute.xlu0 %133
    %vm135 = vcmp.lt.s32.totalorder %v82, 15
    %v136 = vsel %vm135, %v132, %v134
    %v137 = vsel %vm135, %v130, %v132
    %v138 = vsel %vm135, %v128, %v130
    %v139 = vsel %vm135, %v134, %v128
    %v141 = vperm.slane %v58, 0
    %v142 = vperm.slane %v58, 1
    %v143 = vperm.slane %v58, 2
    %v144 = vperm.slane %v58, 3
    %v149 = vmul.f32 %v139, %v141
    %v150 = vmul.f32 %v138, %v142
    %v151 = vmul.f32 %v137, %v143
    %v152 = vmul.f32 %v136, %v144
    %153 = vrot.lane.b32.xlu0 %v69, 1
    %v154 = vpop.permute.xlu0 %153
    %155 = vrot.lane.b32.xlu0 %v70, 1
    %v156 = vpop.permute.xlu0 %155
    %157 = vrot.lane.b32.xlu0 %v71, 1
    %v158 = vpop.permute.xlu0 %157
    %159 = vrot.lane.b32.xlu0 %v72, 1
    %v160 = vpop.permute.xlu0 %159
    %vm161 = vcmp.lt.s32.totalorder %v82, 1
    %v162 = vsel %vm161, %v158, %v160
    %v163 = vsel %vm161, %v156, %v158
    %v164 = vsel %vm161, %v154, %v156
    %v165 = vsel %vm161, %v160, %v154
    %v167 = vperm.slane %v60, 0
    %v168 = vperm.slane %v60, 1
    %v169 = vperm.slane %v60, 2
    %v170 = vperm.slane %v60, 3
    %v175 = vmul.f32 %v165, %v167
    %v176 = vmul.f32 %v164, %v168
    %v177 = vmul.f32 %v163, %v169
    %v178 = vmul.f32 %v162, %v170
    %179 = vrot.lane.b32.xlu0 %v69, 127
    %v180 = vpop.permute.xlu0 %179
    %181 = vrot.lane.b32.xlu0 %v70, 127
    %v182 = vpop.permute.xlu0 %181
    %183 = vrot.lane.b32.xlu0 %v71, 127
    %v184 = vpop.permute.xlu0 %183
    %185 = vrot.lane.b32.xlu0 %v72, 127
    %v186 = vpop.permute.xlu0 %185
    %vm187 = vcmp.lt.s32.totalorder %v82, 127
    %v188 = vsel %vm187, %v184, %v186
    %v189 = vsel %vm187, %v182, %v184
    %v190 = vsel %vm187, %v180, %v182
    %v191 = vsel %vm187, %v186, %v180
    %v193 = vperm.slane %v62, 0
    %v194 = vperm.slane %v62, 1
    %v195 = vperm.slane %v62, 2
    %v196 = vperm.slane %v62, 3
    %v201 = vmul.f32 %v190, %v193
    %v202 = vmul.f32 %v189, %v194
    %v203 = vmul.f32 %v188, %v195
    %v204 = vmul.f32 %v191, %v196
    %205 = vrot.lane.b32.xlu0 %v69, 113
    %v206 = vpop.permute.xlu0 %205
    %207 = vrot.lane.b32.xlu0 %v70, 113
    %v208 = vpop.permute.xlu0 %207
    %209 = vrot.lane.b32.xlu0 %v71, 113
    %v210 = vpop.permute.xlu0 %209
    %211 = vrot.lane.b32.xlu0 %v72, 113
    %v212 = vpop.permute.xlu0 %211
    %vm213 = vcmp.lt.s32.totalorder %v82, 113
    %v214 = vsel %vm213, %v210, %v212
    %v215 = vsel %vm213, %v208, %v210
    %v216 = vsel %vm213, %v206, %v208
    %v217 = vsel %vm213, %v212, %v206
    %v219 = vperm.slane %v64, 0
    %v220 = vperm.slane %v64, 1
    %v221 = vperm.slane %v64, 2
    %v222 = vperm.slane %v64, 3
    %v227 = vmul.f32 %v216, %v219
    %v228 = vmul.f32 %v215, %v220
    %v229 = vmul.f32 %v214, %v221
    %v230 = vmul.f32 %v217, %v222
    %231 = vrot.lane.b32.xlu0 %v69, 112
    %v232 = vpop.permute.xlu0 %231
    %233 = vrot.lane.b32.xlu0 %v70, 112
    %v234 = vpop.permute.xlu0 %233
    %235 = vrot.lane.b32.xlu0 %v71, 112
    %v236 = vpop.permute.xlu0 %235
    %237 = vrot.lane.b32.xlu0 %v72, 112
    %v238 = vpop.permute.xlu0 %237
    %vm239 = vcmp.lt.s32.totalorder %v82, 112
    %v240 = vsel %vm239, %v236, %v238
    %v241 = vsel %vm239, %v234, %v236
    %v242 = vsel %vm239, %v232, %v234
    %v243 = vsel %vm239, %v238, %v232
    %v245 = vperm.slane %v66, 0
    %v246 = vperm.slane %v66, 1
    %v247 = vperm.slane %v66, 2
    %v248 = vperm.slane %v66, 3
    %v253 = vmul.f32 %v242, %v245
    %v254 = vmul.f32 %v241, %v246
    %v255 = vmul.f32 %v240, %v247
    %v256 = vmul.f32 %v243, %v248
    %257 = vrot.lane.b32.xlu0 %v69, 111
    %v258 = vpop.permute.xlu0 %257
    %259 = vrot.lane.b32.xlu0 %v70, 111
    %v260 = vpop.permute.xlu0 %259
    %261 = vrot.lane.b32.xlu0 %v71, 111
    %v262 = vpop.permute.xlu0 %261
    %263 = vrot.lane.b32.xlu0 %v72, 111
    %v264 = vpop.permute.xlu0 %263
    %vm265 = vcmp.lt.s32.totalorder %v82, 111
    %v266 = vsel %vm265, %v262, %v264
    %v267 = vsel %vm265, %v260, %v262
    %v268 = vsel %vm265, %v258, %v260
    %v269 = vsel %vm265, %v264, %v258
    %v271 = vperm.slane %v68, 0
    %v272 = vperm.slane %v68, 1
    %v273 = vperm.slane %v68, 2
    %v274 = vperm.slane %v68, 3
    %v279 = vmul.f32 %v268, %v271
    %v280 = vmul.f32 %v267, %v272
    %v281 = vmul.f32 %v266, %v273
    %v282 = vmul.f32 %v269, %v274
    %v283 = vld [vmem:[%s1] sm:$0xff]
    %v284 = vld [vmem:[%s1 + $0x8] sm:$0xff]
    %v285 = vld [vmem:[%s2] sm:$0xff]
    %v286 = vld [vmem:[%s2 + $0x8] sm:$0xff]
    %288 = vset.pattern.permute.xlu0 0
    %289 = vperm.xlu0 %288, %v285
    %v290 = vpop.permute.xlu0 %289
    %293 = vset.pattern.permute.xlu0 0
    %294 = vperm.xlu0 %293, %v286
    %v295 = vpop.permute.xlu0 %294
    %vm297 = vcmask 588800
    %v299 = vsel %vm297, %v283, 0
    %v302 = vsel %vm297, %v284, 0
    %304 = vmatpush.msra.mxu0 0.0
    %305 = vmatpush.msra.mxu0 0.0
    %306 = vmatpush.msra.mxu0 0.0
    %307 = vmatpush.msra.mxu0 0.0
    %308 = vmatpush.msra.mxu0 0.0
    %309 = vmatpush.msra.mxu0 0.0
    %310 = vmatpush.msra.mxu0 0.0
    %311 = vmatpush.msra.mxu0 %v279
    %312 = vmatpush.msra.mxu0 %v253
    %313 = vmatpush.msra.mxu0 %v227
    %314 = vmatpush.msra.mxu0 %v201
    %315 = vmatpush.msra.mxu0 %v69
    %316 = vmatpush.msra.mxu0 %v175
    %317 = vmatpush.msra.mxu0 %v149
    %318 = vmatpush.msra.mxu0 %v123
    %319 = vmatpush.msra.mxu0 %v97
    %320 = vmatmul.f32.gmra.mxu0 %v299
    %v321 = vpop.f32.mrf.mxu0
    %v322 = vadd.f32 %v290, %v321
    %323 = vmatmul.f32.gmra.mxu0 %v302
    %v324 = vpop.f32.mrf.mxu0
    %v325 = vadd.f32 %v295, %v324
    %326 = vdwg.mxu0
    %327 = vmatpush.msra.mxu0 0.0
    %328 = vmatpush.msra.mxu0 0.0
    %329 = vmatpush.msra.mxu0 0.0
    %330 = vmatpush.msra.mxu0 0.0
    %331 = vmatpush.msra.mxu0 0.0
    %332 = vmatpush.msra.mxu0 0.0
    %333 = vmatpush.msra.mxu0 0.0
    %334 = vmatpush.msra.mxu0 %v280
    %335 = vmatpush.msra.mxu0 %v254
    %336 = vmatpush.msra.mxu0 %v228
    %337 = vmatpush.msra.mxu0 %v202
    %338 = vmatpush.msra.mxu0 %v70
    %339 = vmatpush.msra.mxu0 %v176
    %340 = vmatpush.msra.mxu0 %v150
    %341 = vmatpush.msra.mxu0 %v124
    %342 = vmatpush.msra.mxu0 %v98
    %343 = vmatmul.f32.gmra.mxu0 %v299
    %v344 = vpop.f32.mrf.mxu0
    %v345 = vadd.f32 %v290, %v344
    %346 = vmatmul.f32.gmra.mxu0 %v302
    %v347 = vpop.f32.mrf.mxu0
    %v348 = vadd.f32 %v295, %v347
    %349 = vdwg.mxu0
    %350 = vmatpush.msra.mxu0 0.0
    %351 = vmatpush.msra.mxu0 0.0
    %352 = vmatpush.msra.mxu0 0.0
    %353 = vmatpush.msra.mxu0 0.0
    %354 = vmatpush.msra.mxu0 0.0
    %355 = vmatpush.msra.mxu0 0.0
    %356 = vmatpush.msra.mxu0 0.0
    %357 = vmatpush.msra.mxu0 %v281
    %358 = vmatpush.msra.mxu0 %v255
    %359 = vmatpush.msra.mxu0 %v229
    %360 = vmatpush.msra.mxu0 %v203
    %361 = vmatpush.msra.mxu0 %v71
    %362 = vmatpush.msra.mxu0 %v177
    %363 = vmatpush.msra.mxu0 %v151
    %364 = vmatpush.msra.mxu0 %v125
    %365 = vmatpush.msra.mxu0 %v99
    %366 = vmatmul.f32.gmra.mxu0 %v299
    %v367 = vpop.f32.mrf.mxu0
    %v368 = vadd.f32 %v290, %v367
    %369 = vmatmul.f32.gmra.mxu0 %v302
    %v370 = vpop.f32.mrf.mxu0
    %v371 = vadd.f32 %v295, %v370
    %372 = vdwg.mxu0
    %373 = vmatpush.msra.mxu0 0.0
    %374 = vmatpush.msra.mxu0 0.0
    %375 = vmatpush.msra.mxu0 0.0
    %376 = vmatpush.msra.mxu0 0.0
    %377 = vmatpush.msra.mxu0 0.0
    %378 = vmatpush.msra.mxu0 0.0
    %379 = vmatpush.msra.mxu0 0.0
    %380 = vmatpush.msra.mxu0 %v282
    %381 = vmatpush.msra.mxu0 %v256
    %382 = vmatpush.msra.mxu0 %v230
    %383 = vmatpush.msra.mxu0 %v204
    %384 = vmatpush.msra.mxu0 %v72
    %385 = vmatpush.msra.mxu0 %v178
    %386 = vmatpush.msra.mxu0 %v152
    %387 = vmatpush.msra.mxu0 %v126
    %388 = vmatpush.msra.mxu0 %v100
    %389 = vmatmul.f32.gmra.mxu0 %v299
    %v390 = vpop.f32.mrf.mxu0
    %v391 = vadd.f32 %v290, %v390
    %392 = vmatmul.f32.gmra.mxu0 %v302
    %v393 = vpop.f32.mrf.mxu0
    %v394 = vadd.f32 %v295, %v393
    %395 = vdwg.mxu0
    %396 = vrot.lane.b32.xlu0 %v322, 17
    %v397 = vpop.permute.xlu0 %396
    %398 = vrot.lane.b32.xlu0 %v325, 17
    %v399 = vpop.permute.xlu0 %398
    %400 = vrot.lane.b32.xlu0 %v345, 17
    %v401 = vpop.permute.xlu0 %400
    %402 = vrot.lane.b32.xlu0 %v348, 17
    %v403 = vpop.permute.xlu0 %402
    %404 = vrot.lane.b32.xlu0 %v368, 17
    %v405 = vpop.permute.xlu0 %404
    %406 = vrot.lane.b32.xlu0 %v371, 17
    %v407 = vpop.permute.xlu0 %406
    %408 = vrot.lane.b32.xlu0 %v391, 17
    %v409 = vpop.permute.xlu0 %408
    %410 = vrot.lane.b32.xlu0 %v394, 17
    %v411 = vpop.permute.xlu0 %410
    %v412 = vsel %vm83, %v405, %v409
    %v413 = vsel %vm83, %v407, %v411
    %v414 = vsel %vm83, %v401, %v405
    %v415 = vsel %vm83, %v403, %v407
    %v416 = vsel %vm83, %v397, %v401
    %v417 = vsel %vm83, %v399, %v403
    %v418 = vsel %vm83, %v409, %v397
    %v419 = vsel %vm83, %v411, %v399
    %v420 = vmul.f32 %v418, %v89
    %v421 = vmul.f32 %v416, %v90
    %v422 = vmul.f32 %v414, %v91
    %v423 = vmul.f32 %v412, %v92
    %v424 = vmul.f32 %v419, %v89
    %v425 = vmul.f32 %v417, %v90
    %v426 = vmul.f32 %v415, %v91
    %v427 = vmul.f32 %v413, %v92
    %428 = vrot.lane.b32.xlu0 %v322, 16
    %v429 = vpop.permute.xlu0 %428
    %430 = vrot.lane.b32.xlu0 %v325, 16
    %v431 = vpop.permute.xlu0 %430
    %432 = vrot.lane.b32.xlu0 %v345, 16
    %v433 = vpop.permute.xlu0 %432
    %434 = vrot.lane.b32.xlu0 %v348, 16
    %v435 = vpop.permute.xlu0 %434
    %436 = vrot.lane.b32.xlu0 %v368, 16
    %v437 = vpop.permute.xlu0 %436
    %438 = vrot.lane.b32.xlu0 %v371, 16
    %v439 = vpop.permute.xlu0 %438
    %440 = vrot.lane.b32.xlu0 %v391, 16
    %v441 = vpop.permute.xlu0 %440
    %442 = vrot.lane.b32.xlu0 %v394, 16
    %v443 = vpop.permute.xlu0 %442
    %v444 = vsel %vm109, %v437, %v441
    %v445 = vsel %vm109, %v439, %v443
    %v446 = vsel %vm109, %v433, %v437
    %v447 = vsel %vm109, %v435, %v439
    %v448 = vsel %vm109, %v429, %v433
    %v449 = vsel %vm109, %v431, %v435
    %v450 = vsel %vm109, %v441, %v429
    %v451 = vsel %vm109, %v443, %v431
    %v452 = vmul.f32 %v450, %v115
    %v453 = vmul.f32 %v448, %v116
    %v454 = vmul.f32 %v446, %v117
    %v455 = vmul.f32 %v444, %v118
    %v456 = vmul.f32 %v451, %v115
    %v457 = vmul.f32 %v449, %v116
    %v458 = vmul.f32 %v447, %v117
    %v459 = vmul.f32 %v445, %v118
    %460 = vrot.lane.b32.xlu0 %v322, 15
    %v461 = vpop.permute.xlu0 %460
    %462 = vrot.lane.b32.xlu0 %v325, 15
    %v463 = vpop.permute.xlu0 %462
    %464 = vrot.lane.b32.xlu0 %v345, 15
    %v465 = vpop.permute.xlu0 %464
    %466 = vrot.lane.b32.xlu0 %v348, 15
    %v467 = vpop.permute.xlu0 %466
    %468 = vrot.lane.b32.xlu0 %v368, 15
    %v469 = vpop.permute.xlu0 %468
    %470 = vrot.lane.b32.xlu0 %v371, 15
    %v471 = vpop.permute.xlu0 %470
    %472 = vrot.lane.b32.xlu0 %v391, 15
    %v473 = vpop.permute.xlu0 %472
    %474 = vrot.lane.b32.xlu0 %v394, 15
    %v475 = vpop.permute.xlu0 %474
    %v476 = vsel %vm135, %v469, %v473
    %v477 = vsel %vm135, %v471, %v475
    %v478 = vsel %vm135, %v465, %v469
    %v479 = vsel %vm135, %v467, %v471
    %v480 = vsel %vm135, %v461, %v465
    %v481 = vsel %vm135, %v463, %v467
    %v482 = vsel %vm135, %v473, %v461
    %v483 = vsel %vm135, %v475, %v463
    %v484 = vmul.f32 %v482, %v141
    %v485 = vmul.f32 %v480, %v142
    %v486 = vmul.f32 %v478, %v143
    %v487 = vmul.f32 %v476, %v144
    %v488 = vmul.f32 %v483, %v141
    %v489 = vmul.f32 %v481, %v142
    %v490 = vmul.f32 %v479, %v143
    %v491 = vmul.f32 %v477, %v144
    %492 = vrot.lane.b32.xlu0 %v322, 1
    %v493 = vpop.permute.xlu0 %492
    %494 = vrot.lane.b32.xlu0 %v325, 1
    %v495 = vpop.permute.xlu0 %494
    %496 = vrot.lane.b32.xlu0 %v345, 1
    %v497 = vpop.permute.xlu0 %496
    %498 = vrot.lane.b32.xlu0 %v348, 1
    %v499 = vpop.permute.xlu0 %498
    %500 = vrot.lane.b32.xlu0 %v368, 1
    %v501 = vpop.permute.xlu0 %500
    %502 = vrot.lane.b32.xlu0 %v371, 1
    %v503 = vpop.permute.xlu0 %502
    %504 = vrot.lane.b32.xlu0 %v391, 1
    %v505 = vpop.permute.xlu0 %504
    %506 = vrot.lane.b32.xlu0 %v394, 1
    %v507 = vpop.permute.xlu0 %506
    %v508 = vsel %vm161, %v501, %v505
    %v509 = vsel %vm161, %v503, %v507
    %v510 = vsel %vm161, %v497, %v501
    %v511 = vsel %vm161, %v499, %v503
    %v512 = vsel %vm161, %v493, %v497
    %v513 = vsel %vm161, %v495, %v499
    %v514 = vsel %vm161, %v505, %v493
    %v515 = vsel %vm161, %v507, %v495
    %v516 = vmul.f32 %v514, %v167
    %v517 = vmul.f32 %v512, %v168
    %v518 = vmul.f32 %v510, %v169
    %v519 = vmul.f32 %v508, %v170
    %v520 = vmul.f32 %v515, %v167
    %v521 = vmul.f32 %v513, %v168
    %v522 = vmul.f32 %v511, %v169
    %v523 = vmul.f32 %v509, %v170
    %524 = vrot.lane.b32.xlu0 %v322, 127
    %v525 = vpop.permute.xlu0 %524
    %526 = vrot.lane.b32.xlu0 %v325, 127
    %v527 = vpop.permute.xlu0 %526
    %528 = vrot.lane.b32.xlu0 %v345, 127
    %v529 = vpop.permute.xlu0 %528
    %530 = vrot.lane.b32.xlu0 %v348, 127
    %v531 = vpop.permute.xlu0 %530
    %532 = vrot.lane.b32.xlu0 %v368, 127
    %v533 = vpop.permute.xlu0 %532
    %534 = vrot.lane.b32.xlu0 %v371, 127
    %v535 = vpop.permute.xlu0 %534
    %536 = vrot.lane.b32.xlu0 %v391, 127
    %v537 = vpop.permute.xlu0 %536
    %538 = vrot.lane.b32.xlu0 %v394, 127
    %v539 = vpop.permute.xlu0 %538
    %v540 = vsel %vm187, %v533, %v537
    %v541 = vsel %vm187, %v535, %v539
    %v542 = vsel %vm187, %v529, %v533
    %v543 = vsel %vm187, %v531, %v535
    %v544 = vsel %vm187, %v525, %v529
    %v545 = vsel %vm187, %v527, %v531
    %v546 = vsel %vm187, %v537, %v525
    %v547 = vsel %vm187, %v539, %v527
    %v548 = vmul.f32 %v544, %v193
    %v549 = vmul.f32 %v542, %v194
    %v550 = vmul.f32 %v540, %v195
    %v551 = vmul.f32 %v546, %v196
    %v552 = vmul.f32 %v545, %v193
    %v553 = vmul.f32 %v543, %v194
    %v554 = vmul.f32 %v541, %v195
    %v555 = vmul.f32 %v547, %v196
    %556 = vrot.lane.b32.xlu0 %v322, 113
    %v557 = vpop.permute.xlu0 %556
    %558 = vrot.lane.b32.xlu0 %v325, 113
    %v559 = vpop.permute.xlu0 %558
    %560 = vrot.lane.b32.xlu0 %v345, 113
    %v561 = vpop.permute.xlu0 %560
    %562 = vrot.lane.b32.xlu0 %v348, 113
    %v563 = vpop.permute.xlu0 %562
    %564 = vrot.lane.b32.xlu0 %v368, 113
    %v565 = vpop.permute.xlu0 %564
    %566 = vrot.lane.b32.xlu0 %v371, 113
    %v567 = vpop.permute.xlu0 %566
    %568 = vrot.lane.b32.xlu0 %v391, 113
    %v569 = vpop.permute.xlu0 %568
    %570 = vrot.lane.b32.xlu0 %v394, 113
    %v571 = vpop.permute.xlu0 %570
    %v572 = vsel %vm213, %v565, %v569
    %v573 = vsel %vm213, %v567, %v571
    %v574 = vsel %vm213, %v561, %v565
    %v575 = vsel %vm213, %v563, %v567
    %v576 = vsel %vm213, %v557, %v561
    %v577 = vsel %vm213, %v559, %v563
    %v578 = vsel %vm213, %v569, %v557
    %v579 = vsel %vm213, %v571, %v559
    %v580 = vmul.f32 %v576, %v219
    %v581 = vmul.f32 %v574, %v220
    %v582 = vmul.f32 %v572, %v221
    %v583 = vmul.f32 %v578, %v222
    %v584 = vmul.f32 %v577, %v219
    %v585 = vmul.f32 %v575, %v220
    %v586 = vmul.f32 %v573, %v221
    %v587 = vmul.f32 %v579, %v222
    %588 = vrot.lane.b32.xlu0 %v322, 112
    %v589 = vpop.permute.xlu0 %588
    %590 = vrot.lane.b32.xlu0 %v325, 112
    %v591 = vpop.permute.xlu0 %590
    %592 = vrot.lane.b32.xlu0 %v345, 112
    %v593 = vpop.permute.xlu0 %592
    %594 = vrot.lane.b32.xlu0 %v348, 112
    %v595 = vpop.permute.xlu0 %594
    %596 = vrot.lane.b32.xlu0 %v368, 112
    %v597 = vpop.permute.xlu0 %596
    %598 = vrot.lane.b32.xlu0 %v371, 112
    %v599 = vpop.permute.xlu0 %598
    %600 = vrot.lane.b32.xlu0 %v391, 112
    %v601 = vpop.permute.xlu0 %600
    %602 = vrot.lane.b32.xlu0 %v394, 112
    %v603 = vpop.permute.xlu0 %602
    %v604 = vsel %vm239, %v597, %v601
    %v605 = vsel %vm239, %v599, %v603
    %v606 = vsel %vm239, %v593, %v597
    %v607 = vsel %vm239, %v595, %v599
    %v608 = vsel %vm239, %v589, %v593
    %v609 = vsel %vm239, %v591, %v595
    %v610 = vsel %vm239, %v601, %v589
    %v611 = vsel %vm239, %v603, %v591
    %v612 = vmul.f32 %v608, %v245
    %v613 = vmul.f32 %v606, %v246
    %v614 = vmul.f32 %v604, %v247
    %v615 = vmul.f32 %v610, %v248
    %v616 = vmul.f32 %v609, %v245
    %v617 = vmul.f32 %v607, %v246
    %v618 = vmul.f32 %v605, %v247
    %v619 = vmul.f32 %v611, %v248
    %620 = vrot.lane.b32.xlu0 %v322, 111
    %v621 = vpop.permute.xlu0 %620
    %622 = vrot.lane.b32.xlu0 %v325, 111
    %v623 = vpop.permute.xlu0 %622
    %624 = vrot.lane.b32.xlu0 %v345, 111
    %v625 = vpop.permute.xlu0 %624
    %626 = vrot.lane.b32.xlu0 %v348, 111
    %v627 = vpop.permute.xlu0 %626
    %628 = vrot.lane.b32.xlu0 %v368, 111
    %v629 = vpop.permute.xlu0 %628
    %630 = vrot.lane.b32.xlu0 %v371, 111
    %v631 = vpop.permute.xlu0 %630
    %632 = vrot.lane.b32.xlu0 %v391, 111
    %v633 = vpop.permute.xlu0 %632
    %634 = vrot.lane.b32.xlu0 %v394, 111
    %v635 = vpop.permute.xlu0 %634
    %v636 = vsel %vm265, %v629, %v633
    %v637 = vsel %vm265, %v631, %v635
    %v638 = vsel %vm265, %v625, %v629
    %v639 = vsel %vm265, %v627, %v631
    %v640 = vsel %vm265, %v621, %v625
    %v641 = vsel %vm265, %v623, %v627
    %v642 = vsel %vm265, %v633, %v621
    %v643 = vsel %vm265, %v635, %v623
    %v644 = vmul.f32 %v640, %v271
    %v645 = vmul.f32 %v638, %v272
    %v646 = vmul.f32 %v636, %v273
    %v647 = vmul.f32 %v642, %v274
    %v648 = vmul.f32 %v641, %v271
    %v649 = vmul.f32 %v639, %v272
    %v650 = vmul.f32 %v637, %v273
    %v651 = vmul.f32 %v643, %v274
    %v652 = vld [vmem:[%s3] sm:$0xff]
    %v653 = vld [vmem:[%s3 + $0x8] sm:$0xff]
    %v654 = vld [vmem:[%s3 + $0x10] sm:$0xff]
    %v655 = vld [vmem:[%s3 + $0x18] sm:$0xff]
    %v656 = vld [vmem:[%s4] sm:$0xff]
    %v657 = vld [vmem:[%s4 + $0x8] sm:$0xff]
    %659 = vset.pattern.permute.xlu0 0
    %660 = vperm.xlu0 %659, %v656
    %v661 = vpop.permute.xlu0 %660
    %664 = vset.pattern.permute.xlu0 0
    %665 = vperm.xlu0 %664, %v657
    %v666 = vpop.permute.xlu0 %665
    %vm668 = vcmask 130048
    %v670 = vsel %vm668, %v653, 0
    %v673 = vsel %vm668, %v655, 0
    %675 = vmatpush.msra.mxu0 %v616
    %676 = vmatpush.msra.mxu0 %v612
    %677 = vmatpush.msra.mxu0 %v584
    %678 = vmatpush.msra.mxu0 %v580
    %679 = vmatpush.msra.mxu0 %v552
    %680 = vmatpush.msra.mxu0 %v548
    %681 = vmatpush.msra.mxu0 %v325
    %682 = vmatpush.msra.mxu0 %v322
    %683 = vmatpush.msra.mxu0 %v520
    %684 = vmatpush.msra.mxu0 %v516
    %685 = vmatpush.msra.mxu0 %v488
    %686 = vmatpush.msra.mxu0 %v484
    %687 = vmatpush.msra.mxu0 %v456
    %688 = vmatpush.msra.mxu0 %v452
    %689 = vmatpush.msra.mxu0 %v424
    %690 = vmatpush.msra.mxu0 %v420
    %691 = vmatmul.f32.gmra.mxu0 %v652
    %v692 = vpop.f32.mrf.mxu0
    %v693 = vadd.f32 %v661, %v692
    %694 = vmatmul.f32.gmra.mxu0 %v654
    %v695 = vpop.f32.mrf.mxu0
    %v696 = vadd.f32 %v666, %v695
    %697 = vdwg.mxu0
    %698 = vmatpush.msra.mxu0 0.0
    %699 = vmatpush.msra.mxu0 0.0
    %700 = vmatpush.msra.mxu0 0.0
    %701 = vmatpush.msra.mxu0 0.0
    %702 = vmatpush.msra.mxu0 0.0
    %703 = vmatpush.msra.mxu0 0.0
    %704 = vmatpush.msra.mxu0 0.0
    %705 = vmatpush.msra.mxu0 0.0
    %706 = vmatpush.msra.mxu0 0.0
    %707 = vmatpush.msra.mxu0 0.0
    %708 = vmatpush.msra.mxu0 0.0
    %709 = vmatpush.msra.mxu0 0.0
    %710 = vmatpush.msra.mxu0 0.0
    %711 = vmatpush.msra.mxu0 0.0
    %712 = vmatpush.msra.mxu0 %v648
    %713 = vmatpush.msra.mxu0 %v644
    %714 = vmatmul.f32.gmra.mxu0 %v670
    %v715 = vpop.f32.mrf.mxu0
    %v716 = vadd.f32 %v693, %v715
    %717 = vmatmul.f32.gmra.mxu0 %v673
    %v718 = vpop.f32.mrf.mxu0
    %v719 = vadd.f32 %v696, %v718
    %720 = vdwg.mxu0
    %721 = vmatpush.msra.mxu0 %v617
    %722 = vmatpush.msra.mxu0 %v613
    %723 = vmatpush.msra.mxu0 %v585
    %724 = vmatpush.msra.mxu0 %v581
    %725 = vmatpush.msra.mxu0 %v553
    %726 = vmatpush.msra.mxu0 %v549
    %727 = vmatpush.msra.mxu0 %v348
    %728 = vmatpush.msra.mxu0 %v345
    %729 = vmatpush.msra.mxu0 %v521
    %730 = vmatpush.msra.mxu0 %v517
    %731 = vmatpush.msra.mxu0 %v489
    %732 = vmatpush.msra.mxu0 %v485
    %733 = vmatpush.msra.mxu0 %v457
    %734 = vmatpush.msra.mxu0 %v453
    %735 = vmatpush.msra.mxu0 %v425
    %736 = vmatpush.msra.mxu0 %v421
    %737 = vmatmul.f32.gmra.mxu0 %v652
    %v738 = vpop.f32.mrf.mxu0
    %v739 = vadd.f32 %v661, %v738
    %740 = vmatmul.f32.gmra.mxu0 %v654
    %v741 = vpop.f32.mrf.mxu0
    %v742 = vadd.f32 %v666, %v741
    %743 = vdwg.mxu0
    %744 = vmatpush.msra.mxu0 0.0
    %745 = vmatpush.msra.mxu0 0.0
    %746 = vmatpush.msra.mxu0 0.0
    %747 = vmatpush.msra.mxu0 0.0
    %748 = vmatpush.msra.mxu0 0.0
    %749 = vmatpush.msra.mxu0 0.0
    %750 = vmatpush.msra.mxu0 0.0
    %751 = vmatpush.msra.mxu0 0.0
    %752 = vmatpush.msra.mxu0 0.0
    %753 = vmatpush.msra.mxu0 0.0
    %754 = vmatpush.msra.mxu0 0.0
    %755 = vmatpush.msra.mxu0 0.0
    %756 = vmatpush.msra.mxu0 0.0
    %757 = vmatpush.msra.mxu0 0.0
    %758 = vmatpush.msra.mxu0 %v649
    %759 = vmatpush.msra.mxu0 %v645
    %760 = vmatmul.f32.gmra.mxu0 %v670
    %v761 = vpop.f32.mrf.mxu0
    %v762 = vadd.f32 %v739, %v761
    %763 = vmatmul.f32.gmra.mxu0 %v673
    %v764 = vpop.f32.mrf.mxu0
    %v765 = vadd.f32 %v742, %v764
    %766 = vdwg.mxu0
    %767 = vmatpush.msra.mxu0 %v618
    %768 = vmatpush.msra.mxu0 %v614
    %769 = vmatpush.msra.mxu0 %v586
    %770 = vmatpush.msra.mxu0 %v582
    %771 = vmatpush.msra.mxu0 %v554
    %772 = vmatpush.msra.mxu0 %v550
    %773 = vmatpush.msra.mxu0 %v371
    %774 = vmatpush.msra.mxu0 %v368
    %775 = vmatpush.msra.mxu0 %v522
    %776 = vmatpush.msra.mxu0 %v518
    %777 = vmatpush.msra.mxu0 %v490
    %778 = vmatpush.msra.mxu0 %v486
    %779 = vmatpush.msra.mxu0 %v458
    %780 = vmatpush.msra.mxu0 %v454
    %781 = vmatpush.msra.mxu0 %v426
    %782 = vmatpush.msra.mxu0 %v422
    %783 = vmatmul.f32.gmra.mxu0 %v652
    %v784 = vpop.f32.mrf.mxu0
    %v785 = vadd.f32 %v661, %v784
    %786 = vmatmul.f32.gmra.mxu0 %v654
    %v787 = vpop.f32.mrf.mxu0
    %v788 = vadd.f32 %v666, %v787
    %789 = vdwg.mxu0
    %790 = vmatpush.msra.mxu0 0.0
    %791 = vmatpush.msra.mxu0 0.0
    %792 = vmatpush.msra.mxu0 0.0
    %793 = vmatpush.msra.mxu0 0.0
    %794 = vmatpush.msra.mxu0 0.0
    %795 = vmatpush.msra.mxu0 0.0
    %796 = vmatpush.msra.mxu0 0.0
    %797 = vmatpush.msra.mxu0 0.0
    %798 = vmatpush.msra.mxu0 0.0
    %799 = vmatpush.msra.mxu0 0.0
    %800 = vmatpush.msra.mxu0 0.0
    %801 = vmatpush.msra.mxu0 0.0
    %802 = vmatpush.msra.mxu0 0.0
    %803 = vmatpush.msra.mxu0 0.0
    %804 = vmatpush.msra.mxu0 %v650
    %805 = vmatpush.msra.mxu0 %v646
    %806 = vmatmul.f32.gmra.mxu0 %v670
    %v807 = vpop.f32.mrf.mxu0
    %v808 = vadd.f32 %v785, %v807
    %809 = vmatmul.f32.gmra.mxu0 %v673
    %v810 = vpop.f32.mrf.mxu0
    %v811 = vadd.f32 %v788, %v810
    %812 = vdwg.mxu0
    %813 = vmatpush.msra.mxu0 %v619
    %814 = vmatpush.msra.mxu0 %v615
    %815 = vmatpush.msra.mxu0 %v587
    %816 = vmatpush.msra.mxu0 %v583
    %817 = vmatpush.msra.mxu0 %v555
    %818 = vmatpush.msra.mxu0 %v551
    %819 = vmatpush.msra.mxu0 %v394
    %820 = vmatpush.msra.mxu0 %v391
    %821 = vmatpush.msra.mxu0 %v523
    %822 = vmatpush.msra.mxu0 %v519
    %823 = vmatpush.msra.mxu0 %v491
    %824 = vmatpush.msra.mxu0 %v487
    %825 = vmatpush.msra.mxu0 %v459
    %826 = vmatpush.msra.mxu0 %v455
    %827 = vmatpush.msra.mxu0 %v427
    %828 = vmatpush.msra.mxu0 %v423
    %829 = vmatmul.f32.gmra.mxu0 %v652
    %v830 = vpop.f32.mrf.mxu0
    %v831 = vadd.f32 %v661, %v830
    %832 = vmatmul.f32.gmra.mxu0 %v654
    %v833 = vpop.f32.mrf.mxu0
    %v834 = vadd.f32 %v666, %v833
    %835 = vdwg.mxu0
    %836 = vmatpush.msra.mxu0 0.0
    %837 = vmatpush.msra.mxu0 0.0
    %838 = vmatpush.msra.mxu0 0.0
    %839 = vmatpush.msra.mxu0 0.0
    %840 = vmatpush.msra.mxu0 0.0
    %841 = vmatpush.msra.mxu0 0.0
    %842 = vmatpush.msra.mxu0 0.0
    %843 = vmatpush.msra.mxu0 0.0
    %844 = vmatpush.msra.mxu0 0.0
    %845 = vmatpush.msra.mxu0 0.0
    %846 = vmatpush.msra.mxu0 0.0
    %847 = vmatpush.msra.mxu0 0.0
    %848 = vmatpush.msra.mxu0 0.0
    %849 = vmatpush.msra.mxu0 0.0
    %850 = vmatpush.msra.mxu0 %v651
    %851 = vmatpush.msra.mxu0 %v647
    %852 = vmatmul.f32.gmra.mxu0 %v670
    %v853 = vpop.f32.mrf.mxu0
    %v854 = vadd.f32 %v831, %v853
    %855 = vmatmul.f32.gmra.mxu0 %v673
    %v856 = vpop.f32.mrf.mxu0
    %v857 = vadd.f32 %v834, %v856
    %858 = vdwg.mxu0
    %859 = vrot.lane.b32.xlu0 %v716, 17
    %v860 = vpop.permute.xlu0 %859
    %861 = vrot.lane.b32.xlu0 %v719, 17
    %v862 = vpop.permute.xlu0 %861
    %863 = vrot.lane.b32.xlu0 %v762, 17
    %v864 = vpop.permute.xlu0 %863
    %865 = vrot.lane.b32.xlu0 %v765, 17
    %v866 = vpop.permute.xlu0 %865
    %867 = vrot.lane.b32.xlu0 %v808, 17
    %v868 = vpop.permute.xlu0 %867
    %869 = vrot.lane.b32.xlu0 %v811, 17
    %v870 = vpop.permute.xlu0 %869
    %871 = vrot.lane.b32.xlu0 %v854, 17
    %v872 = vpop.permute.xlu0 %871
    %873 = vrot.lane.b32.xlu0 %v857, 17
    %v874 = vpop.permute.xlu0 %873
    %v875 = vsel %vm83, %v868, %v872
    %v876 = vsel %vm83, %v870, %v874
    %v877 = vsel %vm83, %v864, %v868
    %v878 = vsel %vm83, %v866, %v870
    %v879 = vsel %vm83, %v860, %v864
    %v880 = vsel %vm83, %v862, %v866
    %v881 = vsel %vm83, %v872, %v860
    %v882 = vsel %vm83, %v874, %v862
    %v883 = vmul.f32 %v881, %v89
    %v884 = vmul.f32 %v879, %v90
    %v885 = vmul.f32 %v877, %v91
    %v886 = vmul.f32 %v875, %v92
    %v887 = vmul.f32 %v882, %v89
    %v888 = vmul.f32 %v880, %v90
    %v889 = vmul.f32 %v878, %v91
    %v890 = vmul.f32 %v876, %v92
    %891 = vrot.lane.b32.xlu0 %v716, 16
    %v892 = vpop.permute.xlu0 %891
    %893 = vrot.lane.b32.xlu0 %v719, 16
    %v894 = vpop.permute.xlu0 %893
    %895 = vrot.lane.b32.xlu0 %v762, 16
    %v896 = vpop.permute.xlu0 %895
    %897 = vrot.lane.b32.xlu0 %v765, 16
    %v898 = vpop.permute.xlu0 %897
    %899 = vrot.lane.b32.xlu0 %v808, 16
    %v900 = vpop.permute.xlu0 %899
    %901 = vrot.lane.b32.xlu0 %v811, 16
    %v902 = vpop.permute.xlu0 %901
    %903 = vrot.lane.b32.xlu0 %v854, 16
    %v904 = vpop.permute.xlu0 %903
    %905 = vrot.lane.b32.xlu0 %v857, 16
    %v906 = vpop.permute.xlu0 %905
    %v907 = vsel %vm109, %v900, %v904
    %v908 = vsel %vm109, %v902, %v906
    %v909 = vsel %vm109, %v896, %v900
    %v910 = vsel %vm109, %v898, %v902
    %v911 = vsel %vm109, %v892, %v896
    %v912 = vsel %vm109, %v894, %v898
    %v913 = vsel %vm109, %v904, %v892
    %v914 = vsel %vm109, %v906, %v894
    %v915 = vmul.f32 %v913, %v115
    %v916 = vmul.f32 %v911, %v116
    %v917 = vmul.f32 %v909, %v117
    %v918 = vmul.f32 %v907, %v118
    %v919 = vmul.f32 %v914, %v115
    %v920 = vmul.f32 %v912, %v116
    %v921 = vmul.f32 %v910, %v117
    %v922 = vmul.f32 %v908, %v118
    %923 = vrot.lane.b32.xlu0 %v716, 15
    %v924 = vpop.permute.xlu0 %923
    %925 = vrot.lane.b32.xlu0 %v719, 15
    %v926 = vpop.permute.xlu0 %925
    %927 = vrot.lane.b32.xlu0 %v762, 15
    %v928 = vpop.permute.xlu0 %927
    %929 = vrot.lane.b32.xlu0 %v765, 15
    %v930 = vpop.permute.xlu0 %929
    %931 = vrot.lane.b32.xlu0 %v808, 15
    %v932 = vpop.permute.xlu0 %931
    %933 = vrot.lane.b32.xlu0 %v811, 15
    %v934 = vpop.permute.xlu0 %933
    %935 = vrot.lane.b32.xlu0 %v854, 15
    %v936 = vpop.permute.xlu0 %935
    %937 = vrot.lane.b32.xlu0 %v857, 15
    %v938 = vpop.permute.xlu0 %937
    %v939 = vsel %vm135, %v932, %v936
    %v940 = vsel %vm135, %v934, %v938
    %v941 = vsel %vm135, %v928, %v932
    %v942 = vsel %vm135, %v930, %v934
    %v943 = vsel %vm135, %v924, %v928
    %v944 = vsel %vm135, %v926, %v930
    %v945 = vsel %vm135, %v936, %v924
    %v946 = vsel %vm135, %v938, %v926
    %v947 = vmul.f32 %v945, %v141
    %v948 = vmul.f32 %v943, %v142
    %v949 = vmul.f32 %v941, %v143
    %v950 = vmul.f32 %v939, %v144
    %v951 = vmul.f32 %v946, %v141
    %v952 = vmul.f32 %v944, %v142
    %v953 = vmul.f32 %v942, %v143
    %v954 = vmul.f32 %v940, %v144
    %955 = vrot.lane.b32.xlu0 %v716, 1
    %v956 = vpop.permute.xlu0 %955
    %957 = vrot.lane.b32.xlu0 %v719, 1
    %v958 = vpop.permute.xlu0 %957
    %959 = vrot.lane.b32.xlu0 %v762, 1
    %v960 = vpop.permute.xlu0 %959
    %961 = vrot.lane.b32.xlu0 %v765, 1
    %v962 = vpop.permute.xlu0 %961
    %963 = vrot.lane.b32.xlu0 %v808, 1
    %v964 = vpop.permute.xlu0 %963
    %965 = vrot.lane.b32.xlu0 %v811, 1
    %v966 = vpop.permute.xlu0 %965
    %967 = vrot.lane.b32.xlu0 %v854, 1
    %v968 = vpop.permute.xlu0 %967
    %969 = vrot.lane.b32.xlu0 %v857, 1
    %v970 = vpop.permute.xlu0 %969
    %v971 = vsel %vm161, %v964, %v968
    %v972 = vsel %vm161, %v966, %v970
    %v973 = vsel %vm161, %v960, %v964
    %v974 = vsel %vm161, %v962, %v966
    %v975 = vsel %vm161, %v956, %v960
    %v976 = vsel %vm161, %v958, %v962
    %v977 = vsel %vm161, %v968, %v956
    %v978 = vsel %vm161, %v970, %v958
    %v979 = vmul.f32 %v977, %v167
    %v980 = vmul.f32 %v975, %v168
    %v981 = vmul.f32 %v973, %v169
    %v982 = vmul.f32 %v971, %v170
    %v983 = vmul.f32 %v978, %v167
    %v984 = vmul.f32 %v976, %v168
    %v985 = vmul.f32 %v974, %v169
    %v986 = vmul.f32 %v972, %v170
    %987 = vrot.lane.b32.xlu0 %v716, 127
    %v988 = vpop.permute.xlu0 %987
    %989 = vrot.lane.b32.xlu0 %v719, 127
    %v990 = vpop.permute.xlu0 %989
    %991 = vrot.lane.b32.xlu0 %v762, 127
    %v992 = vpop.permute.xlu0 %991
    %993 = vrot.lane.b32.xlu0 %v765, 127
    %v994 = vpop.permute.xlu0 %993
    %995 = vrot.lane.b32.xlu0 %v808, 127
    %v996 = vpop.permute.xlu0 %995
    %997 = vrot.lane.b32.xlu0 %v811, 127
    %v998 = vpop.permute.xlu0 %997
    %999 = vrot.lane.b32.xlu0 %v854, 127
    %v1000 = vpop.permute.xlu0 %999
    %1001 = vrot.lane.b32.xlu0 %v857, 127
    %v1002 = vpop.permute.xlu0 %1001
    %v1003 = vsel %vm187, %v996, %v1000
    %v1004 = vsel %vm187, %v998, %v1002
    %v1005 = vsel %vm187, %v992, %v996
    %v1006 = vsel %vm187, %v994, %v998
    %v1007 = vsel %vm187, %v988, %v992
    %v1008 = vsel %vm187, %v990, %v994
    %v1009 = vsel %vm187, %v1000, %v988
    %v1010 = vsel %vm187, %v1002, %v990
    %v1011 = vmul.f32 %v1007, %v193
    %v1012 = vmul.f32 %v1005, %v194
    %v1013 = vmul.f32 %v1003, %v195
    %v1014 = vmul.f32 %v1009, %v196
    %v1015 = vmul.f32 %v1008, %v193
    %v1016 = vmul.f32 %v1006, %v194
    %v1017 = vmul.f32 %v1004, %v195
    %v1018 = vmul.f32 %v1010, %v196
    %1019 = vrot.lane.b32.xlu0 %v716, 113
    %v1020 = vpop.permute.xlu0 %1019
    %1021 = vrot.lane.b32.xlu0 %v719, 113
    %v1022 = vpop.permute.xlu0 %1021
    %1023 = vrot.lane.b32.xlu0 %v762, 113
    %v1024 = vpop.permute.xlu0 %1023
    %1025 = vrot.lane.b32.xlu0 %v765, 113
    %v1026 = vpop.permute.xlu0 %1025
    %1027 = vrot.lane.b32.xlu0 %v808, 113
    %v1028 = vpop.permute.xlu0 %1027
    %1029 = vrot.lane.b32.xlu0 %v811, 113
    %v1030 = vpop.permute.xlu0 %1029
    %1031 = vrot.lane.b32.xlu0 %v854, 113
    %v1032 = vpop.permute.xlu0 %1031
    %1033 = vrot.lane.b32.xlu0 %v857, 113
    %v1034 = vpop.permute.xlu0 %1033
    %v1035 = vsel %vm213, %v1028, %v1032
    %v1036 = vsel %vm213, %v1030, %v1034
    %v1037 = vsel %vm213, %v1024, %v1028
    %v1038 = vsel %vm213, %v1026, %v1030
    %v1039 = vsel %vm213, %v1020, %v1024
    %v1040 = vsel %vm213, %v1022, %v1026
    %v1041 = vsel %vm213, %v1032, %v1020
    %v1042 = vsel %vm213, %v1034, %v1022
    %v1043 = vmul.f32 %v1039, %v219
    %v1044 = vmul.f32 %v1037, %v220
    %v1045 = vmul.f32 %v1035, %v221
    %v1046 = vmul.f32 %v1041, %v222
    %v1047 = vmul.f32 %v1040, %v219
    %v1048 = vmul.f32 %v1038, %v220
    %v1049 = vmul.f32 %v1036, %v221
    %v1050 = vmul.f32 %v1042, %v222
    %1051 = vrot.lane.b32.xlu0 %v716, 112
    %v1052 = vpop.permute.xlu0 %1051
    %1053 = vrot.lane.b32.xlu0 %v719, 112
    %v1054 = vpop.permute.xlu0 %1053
    %1055 = vrot.lane.b32.xlu0 %v762, 112
    %v1056 = vpop.permute.xlu0 %1055
    %1057 = vrot.lane.b32.xlu0 %v765, 112
    %v1058 = vpop.permute.xlu0 %1057
    %1059 = vrot.lane.b32.xlu0 %v808, 112
    %v1060 = vpop.permute.xlu0 %1059
    %1061 = vrot.lane.b32.xlu0 %v811, 112
    %v1062 = vpop.permute.xlu0 %1061
    %1063 = vrot.lane.b32.xlu0 %v854, 112
    %v1064 = vpop.permute.xlu0 %1063
    %1065 = vrot.lane.b32.xlu0 %v857, 112
    %v1066 = vpop.permute.xlu0 %1065
    %v1067 = vsel %vm239, %v1060, %v1064
    %v1068 = vsel %vm239, %v1062, %v1066
    %v1069 = vsel %vm239, %v1056, %v1060
    %v1070 = vsel %vm239, %v1058, %v1062
    %v1071 = vsel %vm239, %v1052, %v1056
    %v1072 = vsel %vm239, %v1054, %v1058
    %v1073 = vsel %vm239, %v1064, %v1052
    %v1074 = vsel %vm239, %v1066, %v1054
    %v1075 = vmul.f32 %v1071, %v245
    %v1076 = vmul.f32 %v1069, %v246
    %v1077 = vmul.f32 %v1067, %v247
    %v1078 = vmul.f32 %v1073, %v248
    %v1079 = vmul.f32 %v1072, %v245
    %v1080 = vmul.f32 %v1070, %v246
    %v1081 = vmul.f32 %v1068, %v247
    %v1082 = vmul.f32 %v1074, %v248
    %1083 = vrot.lane.b32.xlu0 %v716, 111
    %v1084 = vpop.permute.xlu0 %1083
    %1085 = vrot.lane.b32.xlu0 %v719, 111
    %v1086 = vpop.permute.xlu0 %1085
    %1087 = vrot.lane.b32.xlu0 %v762, 111
    %v1088 = vpop.permute.xlu0 %1087
    %1089 = vrot.lane.b32.xlu0 %v765, 111
    %v1090 = vpop.permute.xlu0 %1089
    %1091 = vrot.lane.b32.xlu0 %v808, 111
    %v1092 = vpop.permute.xlu0 %1091
    %1093 = vrot.lane.b32.xlu0 %v811, 111
    %v1094 = vpop.permute.xlu0 %1093
    %1095 = vrot.lane.b32.xlu0 %v854, 111
    %v1096 = vpop.permute.xlu0 %1095
    %1097 = vrot.lane.b32.xlu0 %v857, 111
    %v1098 = vpop.permute.xlu0 %1097
    %v1099 = vsel %vm265, %v1092, %v1096
    %v1100 = vsel %vm265, %v1094, %v1098
    %v1101 = vsel %vm265, %v1088, %v1092
    %v1102 = vsel %vm265, %v1090, %v1094
    %v1103 = vsel %vm265, %v1084, %v1088
    %v1104 = vsel %vm265, %v1086, %v1090
    %v1105 = vsel %vm265, %v1096, %v1084
    %v1106 = vsel %vm265, %v1098, %v1086
    %v1107 = vmul.f32 %v1103, %v271
    %v1108 = vmul.f32 %v1101, %v272
    %v1109 = vmul.f32 %v1099, %v273
    %v1110 = vmul.f32 %v1105, %v274
    %v1111 = vmul.f32 %v1104, %v271
    %v1112 = vmul.f32 %v1102, %v272
    %v1113 = vmul.f32 %v1100, %v273
    %v1114 = vmul.f32 %v1106, %v274
    %v1115 = vld [vmem:[%s5] sm:$0xff]
    %v1116 = vld [vmem:[%s5 + $0x8] sm:$0xff]
    %v1117 = vld [vmem:[%s5 + $0x10] sm:$0xff]
    %v1118 = vld [vmem:[%s5 + $0x18] sm:$0xff]
    %v1119 = vld [vmem:[%s6] sm:$0xff]
    %v1120 = vld [vmem:[%s6 + $0x8] sm:$0xff]
    %1122 = vset.pattern.permute.xlu0 0
    %1123 = vperm.xlu0 %1122, %v1119
    %v1124 = vpop.permute.xlu0 %1123
    %1127 = vset.pattern.permute.xlu0 0
    %1128 = vperm.xlu0 %1127, %v1120
    %v1129 = vpop.permute.xlu0 %1128
    %v1132 = vsel %vm668, %v1116, 0
    %v1135 = vsel %vm668, %v1118, 0
    %1137 = vmatpush.msra.mxu0 %v1079
    %1138 = vmatpush.msra.mxu0 %v1075
    %1139 = vmatpush.msra.mxu0 %v1047
    %1140 = vmatpush.msra.mxu0 %v1043
    %1141 = vmatpush.msra.mxu0 %v1015
    %1142 = vmatpush.msra.mxu0 %v1011
    %1143 = vmatpush.msra.mxu0 %v719
    %1144 = vmatpush.msra.mxu0 %v716
    %1145 = vmatpush.msra.mxu0 %v983
    %1146 = vmatpush.msra.mxu0 %v979
    %1147 = vmatpush.msra.mxu0 %v951
    %1148 = vmatpush.msra.mxu0 %v947
    %1149 = vmatpush.msra.mxu0 %v919
    %1150 = vmatpush.msra.mxu0 %v915
    %1151 = vmatpush.msra.mxu0 %v887
    %1152 = vmatpush.msra.mxu0 %v883
    %1153 = vmatmul.f32.gmra.mxu0 %v1115
    %v1154 = vpop.f32.mrf.mxu0
    %v1155 = vadd.f32 %v1124, %v1154
    %1156 = vmatmul.f32.gmra.mxu0 %v1117
    %v1157 = vpop.f32.mrf.mxu0
    %v1158 = vadd.f32 %v1129, %v1157
    %1159 = vdwg.mxu0
    %1160 = vmatpush.msra.mxu0 0.0
    %1161 = vmatpush.msra.mxu0 0.0
    %1162 = vmatpush.msra.mxu0 0.0
    %1163 = vmatpush.msra.mxu0 0.0
    %1164 = vmatpush.msra.mxu0 0.0
    %1165 = vmatpush.msra.mxu0 0.0
    %1166 = vmatpush.msra.mxu0 0.0
    %1167 = vmatpush.msra.mxu0 0.0
    %1168 = vmatpush.msra.mxu0 0.0
    %1169 = vmatpush.msra.mxu0 0.0
    %1170 = vmatpush.msra.mxu0 0.0
    %1171 = vmatpush.msra.mxu0 0.0
    %1172 = vmatpush.msra.mxu0 0.0
    %1173 = vmatpush.msra.mxu0 0.0
    %1174 = vmatpush.msra.mxu0 %v1111
    %1175 = vmatpush.msra.mxu0 %v1107
    %1176 = vmatmul.f32.gmra.mxu0 %v1132
    %v1177 = vpop.f32.mrf.mxu0
    %v1178 = vadd.f32 %v1155, %v1177
    %1179 = vmatmul.f32.gmra.mxu0 %v1135
    %v1180 = vpop.f32.mrf.mxu0
    %v1181 = vadd.f32 %v1158, %v1180
    %1182 = vdwg.mxu0
    %1183 = vmatpush.msra.mxu0 %v1080
    %1184 = vmatpush.msra.mxu0 %v1076
    %1185 = vmatpush.msra.mxu0 %v1048
    %1186 = vmatpush.msra.mxu0 %v1044
    %1187 = vmatpush.msra.mxu0 %v1016
    %1188 = vmatpush.msra.mxu0 %v1012
    %1189 = vmatpush.msra.mxu0 %v765
    %1190 = vmatpush.msra.mxu0 %v762
    %1191 = vmatpush.msra.mxu0 %v984
    %1192 = vmatpush.msra.mxu0 %v980
    %1193 = vmatpush.msra.mxu0 %v952
    %1194 = vmatpush.msra.mxu0 %v948
    %1195 = vmatpush.msra.mxu0 %v920
    %1196 = vmatpush.msra.mxu0 %v916
    %1197 = vmatpush.msra.mxu0 %v888
    %1198 = vmatpush.msra.mxu0 %v884
    %1199 = vmatmul.f32.gmra.mxu0 %v1115
    %v1200 = vpop.f32.mrf.mxu0
    %v1201 = vadd.f32 %v1124, %v1200
    %1202 = vmatmul.f32.gmra.mxu0 %v1117
    %v1203 = vpop.f32.mrf.mxu0
    %v1204 = vadd.f32 %v1129, %v1203
    %1205 = vdwg.mxu0
    %1206 = vmatpush.msra.mxu0 0.0
    %1207 = vmatpush.msra.mxu0 0.0
    %1208 = vmatpush.msra.mxu0 0.0
    %1209 = vmatpush.msra.mxu0 0.0
    %1210 = vmatpush.msra.mxu0 0.0
    %1211 = vmatpush.msra.mxu0 0.0
    %1212 = vmatpush.msra.mxu0 0.0
    %1213 = vmatpush.msra.mxu0 0.0
    %1214 = vmatpush.msra.mxu0 0.0
    %1215 = vmatpush.msra.mxu0 0.0
    %1216 = vmatpush.msra.mxu0 0.0
    %1217 = vmatpush.msra.mxu0 0.0
    %1218 = vmatpush.msra.mxu0 0.0
    %1219 = vmatpush.msra.mxu0 0.0
    %1220 = vmatpush.msra.mxu0 %v1112
    %1221 = vmatpush.msra.mxu0 %v1108
    %1222 = vmatmul.f32.gmra.mxu0 %v1132
    %v1223 = vpop.f32.mrf.mxu0
    %v1224 = vadd.f32 %v1201, %v1223
    %1225 = vmatmul.f32.gmra.mxu0 %v1135
    %v1226 = vpop.f32.mrf.mxu0
    %v1227 = vadd.f32 %v1204, %v1226
    %1228 = vdwg.mxu0
    %1229 = vmatpush.msra.mxu0 %v1081
    %1230 = vmatpush.msra.mxu0 %v1077
    %1231 = vmatpush.msra.mxu0 %v1049
    %1232 = vmatpush.msra.mxu0 %v1045
    %1233 = vmatpush.msra.mxu0 %v1017
    %1234 = vmatpush.msra.mxu0 %v1013
    %1235 = vmatpush.msra.mxu0 %v811
    %1236 = vmatpush.msra.mxu0 %v808
    %1237 = vmatpush.msra.mxu0 %v985
    %1238 = vmatpush.msra.mxu0 %v981
    %1239 = vmatpush.msra.mxu0 %v953
    %1240 = vmatpush.msra.mxu0 %v949
    %1241 = vmatpush.msra.mxu0 %v921
    %1242 = vmatpush.msra.mxu0 %v917
    %1243 = vmatpush.msra.mxu0 %v889
    %1244 = vmatpush.msra.mxu0 %v885
    %1245 = vmatmul.f32.gmra.mxu0 %v1115
    %v1246 = vpop.f32.mrf.mxu0
    %v1247 = vadd.f32 %v1124, %v1246
    %1248 = vmatmul.f32.gmra.mxu0 %v1117
    %v1249 = vpop.f32.mrf.mxu0
    %v1250 = vadd.f32 %v1129, %v1249
    %1251 = vdwg.mxu0
    %1252 = vmatpush.msra.mxu0 0.0
    %1253 = vmatpush.msra.mxu0 0.0
    %1254 = vmatpush.msra.mxu0 0.0
    %1255 = vmatpush.msra.mxu0 0.0
    %1256 = vmatpush.msra.mxu0 0.0
    %1257 = vmatpush.msra.mxu0 0.0
    %1258 = vmatpush.msra.mxu0 0.0
    %1259 = vmatpush.msra.mxu0 0.0
    %1260 = vmatpush.msra.mxu0 0.0
    %1261 = vmatpush.msra.mxu0 0.0
    %1262 = vmatpush.msra.mxu0 0.0
    %1263 = vmatpush.msra.mxu0 0.0
    %1264 = vmatpush.msra.mxu0 0.0
    %1265 = vmatpush.msra.mxu0 0.0
    %1266 = vmatpush.msra.mxu0 %v1113
    %1267 = vmatpush.msra.mxu0 %v1109
    %1268 = vmatmul.f32.gmra.mxu0 %v1132
    %v1269 = vpop.f32.mrf.mxu0
    %v1270 = vadd.f32 %v1247, %v1269
    %1271 = vmatmul.f32.gmra.mxu0 %v1135
    %v1272 = vpop.f32.mrf.mxu0
    %v1273 = vadd.f32 %v1250, %v1272
    %1274 = vdwg.mxu0
    %1275 = vmatpush.msra.mxu0 %v1082
    %1276 = vmatpush.msra.mxu0 %v1078
    %1277 = vmatpush.msra.mxu0 %v1050
    %1278 = vmatpush.msra.mxu0 %v1046
    %1279 = vmatpush.msra.mxu0 %v1018
    %1280 = vmatpush.msra.mxu0 %v1014
    %1281 = vmatpush.msra.mxu0 %v857
    %1282 = vmatpush.msra.mxu0 %v854
    %1283 = vmatpush.msra.mxu0 %v986
    %1284 = vmatpush.msra.mxu0 %v982
    %1285 = vmatpush.msra.mxu0 %v954
    %1286 = vmatpush.msra.mxu0 %v950
    %1287 = vmatpush.msra.mxu0 %v922
    %1288 = vmatpush.msra.mxu0 %v918
    %1289 = vmatpush.msra.mxu0 %v890
    %1290 = vmatpush.msra.mxu0 %v886
    %1291 = vmatmul.f32.gmra.mxu0 %v1115
    %v1292 = vpop.f32.mrf.mxu0
    %v1293 = vadd.f32 %v1124, %v1292
    %1294 = vmatmul.f32.gmra.mxu0 %v1117
    %v1295 = vpop.f32.mrf.mxu0
    %v1296 = vadd.f32 %v1129, %v1295
    %1297 = vdwg.mxu0
    %1298 = vmatpush.msra.mxu0 0.0
    %1299 = vmatpush.msra.mxu0 0.0
    %1300 = vmatpush.msra.mxu0 0.0
    %1301 = vmatpush.msra.mxu0 0.0
    %1302 = vmatpush.msra.mxu0 0.0
    %1303 = vmatpush.msra.mxu0 0.0
    %1304 = vmatpush.msra.mxu0 0.0
    %1305 = vmatpush.msra.mxu0 0.0
    %1306 = vmatpush.msra.mxu0 0.0
    %1307 = vmatpush.msra.mxu0 0.0
    %1308 = vmatpush.msra.mxu0 0.0
    %1309 = vmatpush.msra.mxu0 0.0
    %1310 = vmatpush.msra.mxu0 0.0
    %1311 = vmatpush.msra.mxu0 0.0
    %1312 = vmatpush.msra.mxu0 %v1114
    %1313 = vmatpush.msra.mxu0 %v1110
    %1314 = vmatmul.f32.gmra.mxu0 %v1132
    %v1315 = vpop.f32.mrf.mxu0
    %v1316 = vadd.f32 %v1293, %v1315
    %1317 = vmatmul.f32.gmra.mxu0 %v1135
    %v1318 = vpop.f32.mrf.mxu0
    %v1319 = vadd.f32 %v1296, %v1318
    %1320 = vdwg.mxu0
    %1321 = vrot.lane.b32.xlu0 %v1178, 17
    %v1322 = vpop.permute.xlu0 %1321
    %1323 = vrot.lane.b32.xlu0 %v1181, 17
    %v1324 = vpop.permute.xlu0 %1323
    %1325 = vrot.lane.b32.xlu0 %v1224, 17
    %v1326 = vpop.permute.xlu0 %1325
    %1327 = vrot.lane.b32.xlu0 %v1227, 17
    %v1328 = vpop.permute.xlu0 %1327
    %1329 = vrot.lane.b32.xlu0 %v1270, 17
    %v1330 = vpop.permute.xlu0 %1329
    %1331 = vrot.lane.b32.xlu0 %v1273, 17
    %v1332 = vpop.permute.xlu0 %1331
    %1333 = vrot.lane.b32.xlu0 %v1316, 17
    %v1334 = vpop.permute.xlu0 %1333
    %1335 = vrot.lane.b32.xlu0 %v1319, 17
    %v1336 = vpop.permute.xlu0 %1335
    %v1337 = vsel %vm83, %v1330, %v1334
    %v1338 = vsel %vm83, %v1332, %v1336
    %v1339 = vsel %vm83, %v1326, %v1330
    %v1340 = vsel %vm83, %v1328, %v1332
    %v1341 = vsel %vm83, %v1322, %v1326
    %v1342 = vsel %vm83, %v1324, %v1328
    %v1343 = vsel %vm83, %v1334, %v1322
    %v1344 = vsel %vm83, %v1336, %v1324
    %v1345 = vmul.f32 %v1343, %v89
    %v1346 = vmul.f32 %v1341, %v90
    %v1347 = vmul.f32 %v1339, %v91
    %v1348 = vmul.f32 %v1337, %v92
    %v1349 = vmul.f32 %v1344, %v89
    %v1350 = vmul.f32 %v1342, %v90
    %v1351 = vmul.f32 %v1340, %v91
    %v1352 = vmul.f32 %v1338, %v92
    %1353 = vrot.lane.b32.xlu0 %v1178, 16
    %v1354 = vpop.permute.xlu0 %1353
    %1355 = vrot.lane.b32.xlu0 %v1181, 16
    %v1356 = vpop.permute.xlu0 %1355
    %1357 = vrot.lane.b32.xlu0 %v1224, 16
    %v1358 = vpop.permute.xlu0 %1357
    %1359 = vrot.lane.b32.xlu0 %v1227, 16
    %v1360 = vpop.permute.xlu0 %1359
    %1361 = vrot.lane.b32.xlu0 %v1270, 16
    %v1362 = vpop.permute.xlu0 %1361
    %1363 = vrot.lane.b32.xlu0 %v1273, 16
    %v1364 = vpop.permute.xlu0 %1363
    %1365 = vrot.lane.b32.xlu0 %v1316, 16
    %v1366 = vpop.permute.xlu0 %1365
    %1367 = vrot.lane.b32.xlu0 %v1319, 16
    %v1368 = vpop.permute.xlu0 %1367
    %v1369 = vsel %vm109, %v1362, %v1366
    %v1370 = vsel %vm109, %v1364, %v1368
    %v1371 = vsel %vm109, %v1358, %v1362
    %v1372 = vsel %vm109, %v1360, %v1364
    %v1373 = vsel %vm109, %v1354, %v1358
    %v1374 = vsel %vm109, %v1356, %v1360
    %v1375 = vsel %vm109, %v1366, %v1354
    %v1376 = vsel %vm109, %v1368, %v1356
    %v1377 = vmul.f32 %v1375, %v115
    %v1378 = vmul.f32 %v1373, %v116
    %v1379 = vmul.f32 %v1371, %v117
    %v1380 = vmul.f32 %v1369, %v118
    %v1381 = vmul.f32 %v1376, %v115
    %v1382 = vmul.f32 %v1374, %v116
    %v1383 = vmul.f32 %v1372, %v117
    %v1384 = vmul.f32 %v1370, %v118
    %1385 = vrot.lane.b32.xlu0 %v1178, 15
    %v1386 = vpop.permute.xlu0 %1385
    %1387 = vrot.lane.b32.xlu0 %v1181, 15
    %v1388 = vpop.permute.xlu0 %1387
    %1389 = vrot.lane.b32.xlu0 %v1224, 15
    %v1390 = vpop.permute.xlu0 %1389
    %1391 = vrot.lane.b32.xlu0 %v1227, 15
    %v1392 = vpop.permute.xlu0 %1391
    %1393 = vrot.lane.b32.xlu0 %v1270, 15
    %v1394 = vpop.permute.xlu0 %1393
    %1395 = vrot.lane.b32.xlu0 %v1273, 15
    %v1396 = vpop.permute.xlu0 %1395
    %1397 = vrot.lane.b32.xlu0 %v1316, 15
    %v1398 = vpop.permute.xlu0 %1397
    %1399 = vrot.lane.b32.xlu0 %v1319, 15
    %v1400 = vpop.permute.xlu0 %1399
    %v1401 = vsel %vm135, %v1394, %v1398
    %v1402 = vsel %vm135, %v1396, %v1400
    %v1403 = vsel %vm135, %v1390, %v1394
    %v1404 = vsel %vm135, %v1392, %v1396
    %v1405 = vsel %vm135, %v1386, %v1390
    %v1406 = vsel %vm135, %v1388, %v1392
    %v1407 = vsel %vm135, %v1398, %v1386
    %v1408 = vsel %vm135, %v1400, %v1388
    %v1409 = vmul.f32 %v1407, %v141
    %v1410 = vmul.f32 %v1405, %v142
    %v1411 = vmul.f32 %v1403, %v143
    %v1412 = vmul.f32 %v1401, %v144
    %v1413 = vmul.f32 %v1408, %v141
    %v1414 = vmul.f32 %v1406, %v142
    %v1415 = vmul.f32 %v1404, %v143
    %v1416 = vmul.f32 %v1402, %v144
    %1417 = vrot.lane.b32.xlu0 %v1178, 1
    %v1418 = vpop.permute.xlu0 %1417
    %1419 = vrot.lane.b32.xlu0 %v1181, 1
    %v1420 = vpop.permute.xlu0 %1419
    %1421 = vrot.lane.b32.xlu0 %v1224, 1
    %v1422 = vpop.permute.xlu0 %1421
    %1423 = vrot.lane.b32.xlu0 %v1227, 1
    %v1424 = vpop.permute.xlu0 %1423
    %1425 = vrot.lane.b32.xlu0 %v1270, 1
    %v1426 = vpop.permute.xlu0 %1425
    %1427 = vrot.lane.b32.xlu0 %v1273, 1
    %v1428 = vpop.permute.xlu0 %1427
    %1429 = vrot.lane.b32.xlu0 %v1316, 1
    %v1430 = vpop.permute.xlu0 %1429
    %1431 = vrot.lane.b32.xlu0 %v1319, 1
    %v1432 = vpop.permute.xlu0 %1431
    %v1433 = vsel %vm161, %v1426, %v1430
    %v1434 = vsel %vm161, %v1428, %v1432
    %v1435 = vsel %vm161, %v1422, %v1426
    %v1436 = vsel %vm161, %v1424, %v1428
    %v1437 = vsel %vm161, %v1418, %v1422
    %v1438 = vsel %vm161, %v1420, %v1424
    %v1439 = vsel %vm161, %v1430, %v1418
    %v1440 = vsel %vm161, %v1432, %v1420
    %v1441 = vmul.f32 %v1439, %v167
    %v1442 = vmul.f32 %v1437, %v168
    %v1443 = vmul.f32 %v1435, %v169
    %v1444 = vmul.f32 %v1433, %v170
    %v1445 = vmul.f32 %v1440, %v167
    %v1446 = vmul.f32 %v1438, %v168
    %v1447 = vmul.f32 %v1436, %v169
    %v1448 = vmul.f32 %v1434, %v170
    %1449 = vrot.lane.b32.xlu0 %v1178, 127
    %v1450 = vpop.permute.xlu0 %1449
    %1451 = vrot.lane.b32.xlu0 %v1181, 127
    %v1452 = vpop.permute.xlu0 %1451
    %1453 = vrot.lane.b32.xlu0 %v1224, 127
    %v1454 = vpop.permute.xlu0 %1453
    %1455 = vrot.lane.b32.xlu0 %v1227, 127
    %v1456 = vpop.permute.xlu0 %1455
    %1457 = vrot.lane.b32.xlu0 %v1270, 127
    %v1458 = vpop.permute.xlu0 %1457
    %1459 = vrot.lane.b32.xlu0 %v1273, 127
    %v1460 = vpop.permute.xlu0 %1459
    %1461 = vrot.lane.b32.xlu0 %v1316, 127
    %v1462 = vpop.permute.xlu0 %1461
    %1463 = vrot.lane.b32.xlu0 %v1319, 127
    %v1464 = vpop.permute.xlu0 %1463
    %v1465 = vsel %vm187, %v1458, %v1462
    %v1466 = vsel %vm187, %v1460, %v1464
    %v1467 = vsel %vm187, %v1454, %v1458
    %v1468 = vsel %vm187, %v1456, %v1460
    %v1469 = vsel %vm187, %v1450, %v1454
    %v1470 = vsel %vm187, %v1452, %v1456
    %v1471 = vsel %vm187, %v1462, %v1450
    %v1472 = vsel %vm187, %v1464, %v1452
    %v1473 = vmul.f32 %v1469, %v193
    %v1474 = vmul.f32 %v1467, %v194
    %v1475 = vmul.f32 %v1465, %v195
    %v1476 = vmul.f32 %v1471, %v196
    %v1477 = vmul.f32 %v1470, %v193
    %v1478 = vmul.f32 %v1468, %v194
    %v1479 = vmul.f32 %v1466, %v195
    %v1480 = vmul.f32 %v1472, %v196
    %1481 = vrot.lane.b32.xlu0 %v1178, 113
    %v1482 = vpop.permute.xlu0 %1481
    %1483 = vrot.lane.b32.xlu0 %v1181, 113
    %v1484 = vpop.permute.xlu0 %1483
    %1485 = vrot.lane.b32.xlu0 %v1224, 113
    %v1486 = vpop.permute.xlu0 %1485
    %1487 = vrot.lane.b32.xlu0 %v1227, 113
    %v1488 = vpop.permute.xlu0 %1487
    %1489 = vrot.lane.b32.xlu0 %v1270, 113
    %v1490 = vpop.permute.xlu0 %1489
    %1491 = vrot.lane.b32.xlu0 %v1273, 113
    %v1492 = vpop.permute.xlu0 %1491
    %1493 = vrot.lane.b32.xlu0 %v1316, 113
    %v1494 = vpop.permute.xlu0 %1493
    %1495 = vrot.lane.b32.xlu0 %v1319, 113
    %v1496 = vpop.permute.xlu0 %1495
    %v1497 = vsel %vm213, %v1490, %v1494
    %v1498 = vsel %vm213, %v1492, %v1496
    %v1499 = vsel %vm213, %v1486, %v1490
    %v1500 = vsel %vm213, %v1488, %v1492
    %v1501 = vsel %vm213, %v1482, %v1486
    %v1502 = vsel %vm213, %v1484, %v1488
    %v1503 = vsel %vm213, %v1494, %v1482
    %v1504 = vsel %vm213, %v1496, %v1484
    %v1505 = vmul.f32 %v1501, %v219
    %v1506 = vmul.f32 %v1499, %v220
    %v1507 = vmul.f32 %v1497, %v221
    %v1508 = vmul.f32 %v1503, %v222
    %v1509 = vmul.f32 %v1502, %v219
    %v1510 = vmul.f32 %v1500, %v220
    %v1511 = vmul.f32 %v1498, %v221
    %v1512 = vmul.f32 %v1504, %v222
    %1513 = vrot.lane.b32.xlu0 %v1178, 112
    %v1514 = vpop.permute.xlu0 %1513
    %1515 = vrot.lane.b32.xlu0 %v1181, 112
    %v1516 = vpop.permute.xlu0 %1515
    %1517 = vrot.lane.b32.xlu0 %v1224, 112
    %v1518 = vpop.permute.xlu0 %1517
    %1519 = vrot.lane.b32.xlu0 %v1227, 112
    %v1520 = vpop.permute.xlu0 %1519
    %1521 = vrot.lane.b32.xlu0 %v1270, 112
    %v1522 = vpop.permute.xlu0 %1521
    %1523 = vrot.lane.b32.xlu0 %v1273, 112
    %v1524 = vpop.permute.xlu0 %1523
    %1525 = vrot.lane.b32.xlu0 %v1316, 112
    %v1526 = vpop.permute.xlu0 %1525
    %1527 = vrot.lane.b32.xlu0 %v1319, 112
    %v1528 = vpop.permute.xlu0 %1527
    %v1529 = vsel %vm239, %v1522, %v1526
    %v1530 = vsel %vm239, %v1524, %v1528
    %v1531 = vsel %vm239, %v1518, %v1522
    %v1532 = vsel %vm239, %v1520, %v1524
    %v1533 = vsel %vm239, %v1514, %v1518
    %v1534 = vsel %vm239, %v1516, %v1520
    %v1535 = vsel %vm239, %v1526, %v1514
    %v1536 = vsel %vm239, %v1528, %v1516
    %v1537 = vmul.f32 %v1533, %v245
    %v1538 = vmul.f32 %v1531, %v246
    %v1539 = vmul.f32 %v1529, %v247
    %v1540 = vmul.f32 %v1535, %v248
    %v1541 = vmul.f32 %v1534, %v245
    %v1542 = vmul.f32 %v1532, %v246
    %v1543 = vmul.f32 %v1530, %v247
    %v1544 = vmul.f32 %v1536, %v248
    %1545 = vrot.lane.b32.xlu0 %v1178, 111
    %v1546 = vpop.permute.xlu0 %1545
    %1547 = vrot.lane.b32.xlu0 %v1181, 111
    %v1548 = vpop.permute.xlu0 %1547
    %1549 = vrot.lane.b32.xlu0 %v1224, 111
    %v1550 = vpop.permute.xlu0 %1549
    %1551 = vrot.lane.b32.xlu0 %v1227, 111
    %v1552 = vpop.permute.xlu0 %1551
    %1553 = vrot.lane.b32.xlu0 %v1270, 111
    %v1554 = vpop.permute.xlu0 %1553
    %1555 = vrot.lane.b32.xlu0 %v1273, 111
    %v1556 = vpop.permute.xlu0 %1555
    %1557 = vrot.lane.b32.xlu0 %v1316, 111
    %v1558 = vpop.permute.xlu0 %1557
    %1559 = vrot.lane.b32.xlu0 %v1319, 111
    %v1560 = vpop.permute.xlu0 %1559
    %v1561 = vsel %vm265, %v1554, %v1558
    %v1562 = vsel %vm265, %v1556, %v1560
    %v1563 = vsel %vm265, %v1550, %v1554
    %v1564 = vsel %vm265, %v1552, %v1556
    %v1565 = vsel %vm265, %v1546, %v1550
    %v1566 = vsel %vm265, %v1548, %v1552
    %v1567 = vsel %vm265, %v1558, %v1546
    %v1568 = vsel %vm265, %v1560, %v1548
    %v1569 = vmul.f32 %v1565, %v271
    %v1570 = vmul.f32 %v1563, %v272
    %v1571 = vmul.f32 %v1561, %v273
    %v1572 = vmul.f32 %v1567, %v274
    %v1573 = vmul.f32 %v1566, %v271
    %v1574 = vmul.f32 %v1564, %v272
    %v1575 = vmul.f32 %v1562, %v273
    %v1576 = vmul.f32 %v1568, %v274
    %v1577 = vld [vmem:[%s7] sm:$0x3f]
    %v1578 = vld [vmem:[%s7 + $0x8] sm:$0x3f]
    %v1579 = vld [vmem:[%s8] sm:$0x3f]
    %1581 = vset.pattern.permute.xlu0 0
    %1582 = vperm.xlu0 %1581, %v1579
    %v1583 = vpop.permute.xlu0 %1582
    %v1586 = vsel %vm668, %v1578, 0
    %1588 = vmatpush.msra.mxu0 %v1541
    %1589 = vmatpush.msra.mxu0 %v1537
    %1590 = vmatpush.msra.mxu0 %v1509
    %1591 = vmatpush.msra.mxu0 %v1505
    %1592 = vmatpush.msra.mxu0 %v1477
    %1593 = vmatpush.msra.mxu0 %v1473
    %1594 = vmatpush.msra.mxu0 %v1181
    %1595 = vmatpush.msra.mxu0 %v1178
    %1596 = vmatpush.msra.mxu0 %v1445
    %1597 = vmatpush.msra.mxu0 %v1441
    %1598 = vmatpush.msra.mxu0 %v1413
    %1599 = vmatpush.msra.mxu0 %v1409
    %1600 = vmatpush.msra.mxu0 %v1381
    %1601 = vmatpush.msra.mxu0 %v1377
    %1602 = vmatpush.msra.mxu0 %v1349
    %1603 = vmatpush.msra.mxu0 %v1345
    %1604 = vmatmul.f32.gmra.mxu0 %v1577
    %v1605 = vpop.f32.mrf.mxu0
    %v1606 = vadd.f32 %v1583, %v1605
    %1607 = vdwg.mxu0
    %1608 = vmatpush.msra.mxu0 0.0
    %1609 = vmatpush.msra.mxu0 0.0
    %1610 = vmatpush.msra.mxu0 0.0
    %1611 = vmatpush.msra.mxu0 0.0
    %1612 = vmatpush.msra.mxu0 0.0
    %1613 = vmatpush.msra.mxu0 0.0
    %1614 = vmatpush.msra.mxu0 0.0
    %1615 = vmatpush.msra.mxu0 0.0
    %1616 = vmatpush.msra.mxu0 0.0
    %1617 = vmatpush.msra.mxu0 0.0
    %1618 = vmatpush.msra.mxu0 0.0
    %1619 = vmatpush.msra.mxu0 0.0
    %1620 = vmatpush.msra.mxu0 0.0
    %1621 = vmatpush.msra.mxu0 0.0
    %1622 = vmatpush.msra.mxu0 %v1573
    %1623 = vmatpush.msra.mxu0 %v1569
    %1624 = vmatmul.f32.gmra.mxu0 %v1586
    %v1625 = vpop.f32.mrf.mxu0
    %v1626 = vadd.f32 %v1606, %v1625
    %1627 = vdwg.mxu0
    %1628 = vmatpush.msra.mxu0 %v1542
    %1629 = vmatpush.msra.mxu0 %v1538
    %1630 = vmatpush.msra.mxu0 %v1510
    %1631 = vmatpush.msra.mxu0 %v1506
    %1632 = vmatpush.msra.mxu0 %v1478
    %1633 = vmatpush.msra.mxu0 %v1474
    %1634 = vmatpush.msra.mxu0 %v1227
    %1635 = vmatpush.msra.mxu0 %v1224
    %1636 = vmatpush.msra.mxu0 %v1446
    %1637 = vmatpush.msra.mxu0 %v1442
    %1638 = vmatpush.msra.mxu0 %v1414
    %1639 = vmatpush.msra.mxu0 %v1410
    %1640 = vmatpush.msra.mxu0 %v1382
    %1641 = vmatpush.msra.mxu0 %v1378
    %1642 = vmatpush.msra.mxu0 %v1350
    %1643 = vmatpush.msra.mxu0 %v1346
    %1644 = vmatmul.f32.gmra.mxu0 %v1577
    %v1645 = vpop.f32.mrf.mxu0
    %v1646 = vadd.f32 %v1583, %v1645
    %1647 = vdwg.mxu0
    %1648 = vmatpush.msra.mxu0 0.0
    %1649 = vmatpush.msra.mxu0 0.0
    %1650 = vmatpush.msra.mxu0 0.0
    %1651 = vmatpush.msra.mxu0 0.0
    %1652 = vmatpush.msra.mxu0 0.0
    %1653 = vmatpush.msra.mxu0 0.0
    %1654 = vmatpush.msra.mxu0 0.0
    %1655 = vmatpush.msra.mxu0 0.0
    %1656 = vmatpush.msra.mxu0 0.0
    %1657 = vmatpush.msra.mxu0 0.0
    %1658 = vmatpush.msra.mxu0 0.0
    %1659 = vmatpush.msra.mxu0 0.0
    %1660 = vmatpush.msra.mxu0 0.0
    %1661 = vmatpush.msra.mxu0 0.0
    %1662 = vmatpush.msra.mxu0 %v1574
    %1663 = vmatpush.msra.mxu0 %v1570
    %1664 = vmatmul.f32.gmra.mxu0 %v1586
    %v1665 = vpop.f32.mrf.mxu0
    %v1666 = vadd.f32 %v1646, %v1665
    %1667 = vdwg.mxu0
    %1668 = vmatpush.msra.mxu0 %v1543
    %1669 = vmatpush.msra.mxu0 %v1539
    %1670 = vmatpush.msra.mxu0 %v1511
    %1671 = vmatpush.msra.mxu0 %v1507
    %1672 = vmatpush.msra.mxu0 %v1479
    %1673 = vmatpush.msra.mxu0 %v1475
    %1674 = vmatpush.msra.mxu0 %v1273
    %1675 = vmatpush.msra.mxu0 %v1270
    %1676 = vmatpush.msra.mxu0 %v1447
    %1677 = vmatpush.msra.mxu0 %v1443
    %1678 = vmatpush.msra.mxu0 %v1415
    %1679 = vmatpush.msra.mxu0 %v1411
    %1680 = vmatpush.msra.mxu0 %v1383
    %1681 = vmatpush.msra.mxu0 %v1379
    %1682 = vmatpush.msra.mxu0 %v1351
    %1683 = vmatpush.msra.mxu0 %v1347
    %1684 = vmatmul.f32.gmra.mxu0 %v1577
    %v1685 = vpop.f32.mrf.mxu0
    %v1686 = vadd.f32 %v1583, %v1685
    %1687 = vdwg.mxu0
    %1688 = vmatpush.msra.mxu0 0.0
    %1689 = vmatpush.msra.mxu0 0.0
    %1690 = vmatpush.msra.mxu0 0.0
    %1691 = vmatpush.msra.mxu0 0.0
    %1692 = vmatpush.msra.mxu0 0.0
    %1693 = vmatpush.msra.mxu0 0.0
    %1694 = vmatpush.msra.mxu0 0.0
    %1695 = vmatpush.msra.mxu0 0.0
    %1696 = vmatpush.msra.mxu0 0.0
    %1697 = vmatpush.msra.mxu0 0.0
    %1698 = vmatpush.msra.mxu0 0.0
    %1699 = vmatpush.msra.mxu0 0.0
    %1700 = vmatpush.msra.mxu0 0.0
    %1701 = vmatpush.msra.mxu0 0.0
    %1702 = vmatpush.msra.mxu0 %v1575
    %1703 = vmatpush.msra.mxu0 %v1571
    %1704 = vmatmul.f32.gmra.mxu0 %v1586
    %v1705 = vpop.f32.mrf.mxu0
    %v1706 = vadd.f32 %v1686, %v1705
    %1707 = vdwg.mxu0
    %1708 = vmatpush.msra.mxu0 %v1544
    %1709 = vmatpush.msra.mxu0 %v1540
    %1710 = vmatpush.msra.mxu0 %v1512
    %1711 = vmatpush.msra.mxu0 %v1508
    %1712 = vmatpush.msra.mxu0 %v1480
    %1713 = vmatpush.msra.mxu0 %v1476
    %1714 = vmatpush.msra.mxu0 %v1319
    %1715 = vmatpush.msra.mxu0 %v1316
    %1716 = vmatpush.msra.mxu0 %v1448
    %1717 = vmatpush.msra.mxu0 %v1444
    %1718 = vmatpush.msra.mxu0 %v1416
    %1719 = vmatpush.msra.mxu0 %v1412
    %1720 = vmatpush.msra.mxu0 %v1384
    %1721 = vmatpush.msra.mxu0 %v1380
    %1722 = vmatpush.msra.mxu0 %v1352
    %1723 = vmatpush.msra.mxu0 %v1348
    %1724 = vmatmul.f32.gmra.mxu0 %v1577
    %v1725 = vpop.f32.mrf.mxu0
    %v1726 = vadd.f32 %v1583, %v1725
    %1727 = vdwg.mxu0
    %1728 = vmatpush.msra.mxu0 0.0
    %1729 = vmatpush.msra.mxu0 0.0
    %1730 = vmatpush.msra.mxu0 0.0
    %1731 = vmatpush.msra.mxu0 0.0
    %1732 = vmatpush.msra.mxu0 0.0
    %1733 = vmatpush.msra.mxu0 0.0
    %1734 = vmatpush.msra.mxu0 0.0
    %1735 = vmatpush.msra.mxu0 0.0
    %1736 = vmatpush.msra.mxu0 0.0
    %1737 = vmatpush.msra.mxu0 0.0
    %1738 = vmatpush.msra.mxu0 0.0
    %1739 = vmatpush.msra.mxu0 0.0
    %1740 = vmatpush.msra.mxu0 0.0
    %1741 = vmatpush.msra.mxu0 0.0
    %1742 = vmatpush.msra.mxu0 %v1576
    %1743 = vmatpush.msra.mxu0 %v1572
    %1744 = vmatmul.f32.gmra.mxu0 %v1586
    %v1745 = vpop.f32.mrf.mxu0
    %v1746 = vadd.f32 %v1726, %v1745
    %1747 = vdwg.mxu0
    %v1748 = vld [vmem:[#allocation2] sm:$0xff]
    %v1749 = vld [vmem:[#allocation2 + $0x8] sm:$0xff]
    %v1750 = vld [vmem:[#allocation2 + $0x10] sm:$0xff]
    %v1751 = vld [vmem:[#allocation2 + $0x18] sm:$0xff]
    %v1752 = vld [vmem:[#allocation2 + $0x20] sm:$0xff]
    %v1753 = vld [vmem:[#allocation2 + $0x28] sm:$0xff]
    %v1754 = vld [vmem:[#allocation2 + $0x30] sm:$0xff]
    %v1755 = vld [vmem:[#allocation2 + $0x38] sm:$0xff]
    %v1756 = vld [vmem:[#allocation2 + $0x40] sm:$0xff]
    %v1757 = vld [vmem:[#allocation2 + $0x48] sm:$0xff]
    %v1758 = vld [vmem:[#allocation2 + $0x50] sm:$0xff]
    %v1759 = vld [vmem:[#allocation2 + $0x58] sm:$0xff]
    %v1760 = vld [vmem:[#allocation2 + $0x60] sm:$0xff]
    %v1761 = vld [vmem:[#allocation2 + $0x68] sm:$0xff]
    %v1762 = vld [vmem:[#allocation2 + $0x70] sm:$0xff]
    %v1763 = vld [vmem:[#allocation2 + $0x78] sm:$0xff]
    %v1764 = vld [vmem:[#allocation2 + $0x80] sm:$0xff]
    %v1765 = vld [vmem:[#allocation2 + $0x88] sm:$0xff]
    %v1766 = vld [vmem:[#allocation2 + $0x90] sm:$0xff]
    %v1767 = vld [vmem:[#allocation2 + $0x98] sm:$0xff]
    %v1768 = vld [vmem:[#allocation2 + $0xa0] sm:$0xff]
    %v1769 = vld [vmem:[#allocation2 + $0xa8] sm:$0xff]
    %v1770 = vld [vmem:[#allocation2 + $0xb0] sm:$0xff]
    %v1771 = vld [vmem:[#allocation2 + $0xb8] sm:$0xff]
    %v1772 = vld [vmem:[#allocation2 + $0xc0] sm:$0xff]
    %v1773 = vld [vmem:[#allocation2 + $0xc8] sm:$0xff]
    %v1774 = vld [vmem:[#allocation2 + $0xd0] sm:$0xff]
    %v1775 = vld [vmem:[#allocation2 + $0xd8] sm:$0xff]
    %v1776 = vld [vmem:[#allocation2 + $0xe0] sm:$0xff]
    %v1777 = vld [vmem:[#allocation2 + $0xe8] sm:$0xff]
    %v1778 = vld [vmem:[#allocation2 + $0xf0] sm:$0xff]
    %v1779 = vld [vmem:[#allocation2 + $0xf8] sm:$0xff]
    %v1780 = vld [vmem:[#allocation2 + $0x100] sm:$0xff]
    %v1781 = vld [vmem:[#allocation2 + $0x108] sm:$0xff]
    %v1782 = vld [vmem:[#allocation2 + $0x110] sm:$0xff]
    %v1783 = vld [vmem:[#allocation2 + $0x118] sm:$0xff]
    %v1784 = vld [vmem:[#allocation2 + $0x120] sm:$0xff]
    %v1785 = vld [vmem:[#allocation2 + $0x128] sm:$0xff]
    %v1786 = vld [vmem:[#allocation2 + $0x130] sm:$0xff]
    %v1787 = vld [vmem:[#allocation2 + $0x138] sm:$0xff]
    %v1788 = vld [vmem:[#allocation2 + $0x140] sm:$0xff]
    %v1789 = vld [vmem:[#allocation2 + $0x148] sm:$0xff]
    %v1790 = vld [vmem:[#allocation2 + $0x150] sm:$0xff]
    %v1791 = vld [vmem:[#allocation2 + $0x158] sm:$0xff]
    %v1792 = vld [vmem:[#allocation2 + $0x160] sm:$0xff]
    %v1793 = vld [vmem:[#allocation2 + $0x168] sm:$0xff]
    %v1794 = vld [vmem:[#allocation2 + $0x170] sm:$0xff]
    %v1795 = vld [vmem:[#allocation2 + $0x178] sm:$0xff]
    %v1796 = vld [vmem:[#allocation2 + $0x180] sm:$0xff]
    %v1797 = vld [vmem:[#allocation2 + $0x188] sm:$0xff]
    %v1798 = vld [vmem:[#allocation2 + $0x190] sm:$0xff]
    %v1799 = vld [vmem:[#allocation2 + $0x198] sm:$0xff]
    %v1800 = vld [vmem:[#allocation2 + $0x1a0] sm:$0xff]
    %v1801 = vld [vmem:[#allocation2 + $0x1a8] sm:$0xff]
    %v1802 = vld [vmem:[#allocation2 + $0x1b0] sm:$0xff]
    %v1803 = vld [vmem:[#allocation2 + $0x1b8] sm:$0xff]
    %v1804 = vld [vmem:[#allocation2 + $0x1c0] sm:$0xff]
    %v1805 = vld [vmem:[#allocation2 + $0x1c8] sm:$0xff]
    %v1806 = vld [vmem:[#allocation2 + $0x1d0] sm:$0xff]
    %v1807 = vld [vmem:[#allocation2 + $0x1d8] sm:$0xff]
    %v1808 = vld [vmem:[#allocation2 + $0x1e0] sm:$0xff]
    %v1809 = vld [vmem:[#allocation2 + $0x1e8] sm:$0xff]
    %v1810 = vld [vmem:[#allocation2 + $0x1f0] sm:$0xff]
    %v1811 = vld [vmem:[#allocation2 + $0x1f8] sm:$0xff]
    %1812 = vmatpush.msra.mxu0 %v1763
    %1813 = vmatpush.msra.mxu0 %v1762
    %1814 = vmatpush.msra.mxu0 %v1761
    %1815 = vmatpush.msra.mxu0 %v1760
    %1816 = vmatpush.msra.mxu0 %v1759
    %1817 = vmatpush.msra.mxu0 %v1758
    %1818 = vmatpush.msra.mxu0 %v1757
    %1819 = vmatpush.msra.mxu0 %v1756
    %1820 = vmatpush.msra.mxu0 %v1755
    %1821 = vmatpush.msra.mxu0 %v1754
    %1822 = vmatpush.msra.mxu0 %v1753
    %1823 = vmatpush.msra.mxu0 %v1752
    %1824 = vmatpush.msra.mxu0 %v1751
    %1825 = vmatpush.msra.mxu0 %v1750
    %1826 = vmatpush.msra.mxu0 %v1749
    %1827 = vmatpush.msra.mxu0 %v1748
    %1828 = vmatmul.f32.gmra.mxu0 %v1626
    %v1829 = vpop.f32.mrf.mxu0
    %v1830 = vadd.f32 0.0, %v1829
    %1831 = vdwg.mxu0
    %1832 = vmatpush.msra.mxu0 %v1779
    %1833 = vmatpush.msra.mxu0 %v1778
    %1834 = vmatpush.msra.mxu0 %v1777
    %1835 = vmatpush.msra.mxu0 %v1776
    %1836 = vmatpush.msra.mxu0 %v1775
    %1837 = vmatpush.msra.mxu0 %v1774
    %1838 = vmatpush.msra.mxu0 %v1773
    %1839 = vmatpush.msra.mxu0 %v1772
    %1840 = vmatpush.msra.mxu0 %v1771
    %1841 = vmatpush.msra.mxu0 %v1770
    %1842 = vmatpush.msra.mxu0 %v1769
    %1843 = vmatpush.msra.mxu0 %v1768
    %1844 = vmatpush.msra.mxu0 %v1767
    %1845 = vmatpush.msra.mxu0 %v1766
    %1846 = vmatpush.msra.mxu0 %v1765
    %1847 = vmatpush.msra.mxu0 %v1764
    %1848 = vmatmul.f32.gmra.mxu0 %v1666
    %v1849 = vpop.f32.mrf.mxu0
    %v1850 = vadd.f32 %v1830, %v1849
    %1851 = vdwg.mxu0
    %1852 = vmatpush.msra.mxu0 %v1795
    %1853 = vmatpush.msra.mxu0 %v1794
    %1854 = vmatpush.msra.mxu0 %v1793
    %1855 = vmatpush.msra.mxu0 %v1792
    %1856 = vmatpush.msra.mxu0 %v1791
    %1857 = vmatpush.msra.mxu0 %v1790
    %1858 = vmatpush.msra.mxu0 %v1789
    %1859 = vmatpush.msra.mxu0 %v1788
    %1860 = vmatpush.msra.mxu0 %v1787
    %1861 = vmatpush.msra.mxu0 %v1786
    %1862 = vmatpush.msra.mxu0 %v1785
    %1863 = vmatpush.msra.mxu0 %v1784
    %1864 = vmatpush.msra.mxu0 %v1783
    %1865 = vmatpush.msra.mxu0 %v1782
    %1866 = vmatpush.msra.mxu0 %v1781
    %1867 = vmatpush.msra.mxu0 %v1780
    %1868 = vmatmul.f32.gmra.mxu0 %v1706
    %v1869 = vpop.f32.mrf.mxu0
    %v1870 = vadd.f32 %v1850, %v1869
    %1871 = vdwg.mxu0
    %1872 = vmatpush.msra.mxu0 %v1811
    %1873 = vmatpush.msra.mxu0 %v1810
    %1874 = vmatpush.msra.mxu0 %v1809
    %1875 = vmatpush.msra.mxu0 %v1808
    %1876 = vmatpush.msra.mxu0 %v1807
    %1877 = vmatpush.msra.mxu0 %v1806
    %1878 = vmatpush.msra.mxu0 %v1805
    %1879 = vmatpush.msra.mxu0 %v1804
    %1880 = vmatpush.msra.mxu0 %v1803
    %1881 = vmatpush.msra.mxu0 %v1802
    %1882 = vmatpush.msra.mxu0 %v1801
    %1883 = vmatpush.msra.mxu0 %v1800
    %1884 = vmatpush.msra.mxu0 %v1799
    %1885 = vmatpush.msra.mxu0 %v1798
    %1886 = vmatpush.msra.mxu0 %v1797
    %1887 = vmatpush.msra.mxu0 %v1796
    %1888 = vmatmul.f32.gmra.mxu0 %v1746
    %v1889 = vpop.f32.mrf.mxu0
    %v1890 = vadd.f32 %v1870, %v1889
    %1891 = vdwg.mxu0
    %1892 = vst [vmem:[%s11] sm:$0x3f] %v1890
    // Predicated region
    $region50: #{wae_dec_forward.1} parent=1 // pred_check
      _
    $region51: #{wae_dec_forward.1} parent=1 // pred_check_branch
      %1894 = sbr.rel (0) target = $region53
    $region52: #{wae_dec_forward.1} parent=1 // pred_region
      _
    $region53: #{wae_dec_forward.1} parent=1 // pred_fallthru
      _
    // Predicated region
    $region54: #{wae_dec_forward.1} parent=1 // pred_check
      _
    $region55: #{wae_dec_forward.1} parent=1 // pred_check_branch
      %1896 = sbr.rel (0) target = $region57
    $region56: #{wae_dec_forward.1} parent=1 // pred_region
      _
    $region57: #{wae_dec_forward.1} parent=1 // pred_fallthru
      _
    %1897 = vsyncpa [#allocation3], 1

</llo_original>
